<compile_context>
chip_gen: v5e
topology: v5e:2x2
jax: 0.10.0
libtpu: 0.0.40
codegen_flags: <defaults>
</compile_context>

<pallas_src>
import jax
import jax.numpy as jnp
from jax.experimental import pallas as pl
from jax.experimental.pallas import tpu as pltpu

LANE = 128


def _round_up(x, m):
    return (x + m - 1) // m * m


def _tap_offsets(num_layers, causal_conv):
    offs = []
    for l in range(num_layers):
        d = 2 ** l
        offs.append((-2 * d, -d, 0) if causal_conv else (-d, 0, d))
    return offs


# ----------------------------------------------------------------------------
# Fused kernel (stage1 + all refinement stages, batch folded into lanes)
# ----------------------------------------------------------------------------
def make_fused_kernel(*, num_layers, num_stages, causal_conv, f_maps,
                      seq_len, t_pad, lanes, matmul_dtype):
    num_refine = num_stages - 1
    tap_offsets = _tap_offsets(num_layers, causal_conv)
    approx_recip = jnp.dtype(matmul_dtype) != jnp.dtype(jnp.float32)

    def build_masks():
        # Hoisted: one iota + one mask per distinct offset (<= 2*num_layers),
        # reused across all layers and stages.  t = lane % t_pad is the position
        # inside its own (possibly padded) sequence, so rolls over the flattened
        # batch*time lane axis never leak across sequences or into the T-pad tail.
        t_idx = jax.lax.broadcasted_iota(jnp.int32, (f_maps, lanes), 1) % t_pad
        masks = {}
        for offs in tap_offsets:
            for off in offs:
                if off != 0 and off not in masks:
                    masks[off] = jnp.logical_and(t_idx + off >= 0,
                                                 t_idx + off < seq_len)
        return masks

    def shift(h, off, masks):
        # result[:, p] = h[:, p + off] when the source position is inside the
        # valid [0, seq_len) window of the same sequence, else 0 (conv zero-pad).
        if off == 0:
            return h
        rolled = pltpu.roll(h, shift=(-off) % lanes, axis=1)
        return jnp.where(masks[off], rolled, 0.0)

    def single_stage(inp, masks, w_in, b_in, wd, bd, w1, b1, w_out, b_out):
        # inp: (C_in, lanes) f32; weights already in matmul_dtype, biases f32.
        h = jnp.dot(w_in, inp.astype(matmul_dtype),
                    preferred_element_type=jnp.float32) + b_in                # (F, lanes)
        for l in range(num_layers):
            # fused 3-tap dilated conv: one K=3F matmul on a shifted slab
            slab = jnp.concatenate([shift(h, off, masks) for off in tap_offsets[l]],
                                   axis=0)                                    # (3F, lanes)
            # TODO(synk): on v5e (single vector-store slot) accumulate three
            # per-tap dots instead of materializing the (3F, lanes) slab copy.
            c = jnp.dot(wd[l], slab.astype(matmul_dtype),
                        preferred_element_type=jnp.float32)
            c = jnp.maximum(c + bd[l], 0.0)                                   # ReLU
            c = jnp.dot(w1[l], c.astype(matmul_dtype),
                        preferred_element_type=jnp.float32) + b1[l]           # 1x1 conv
            h = h + c                                                         # residual (dropout = eval identity)
        return jnp.dot(w_out, h.astype(matmul_dtype),
                       preferred_element_type=jnp.float32) + b_out            # (n_cls, lanes)

    def softmax_channels(x):
        # PyTorch softmax(dim=1) == channel axis == sublane axis 0 here.
        m = jnp.max(x, axis=0, keepdims=True)
        e = jnp.exp(x - m)
        s = jnp.sum(e, axis=0, keepdims=True)
        if approx_recip:
            return e * pl.reciprocal(s, approx=True)   # EUP slot; noise << bf16 error
        return e / s                                   # exact for the f32 parity path

    def kernel(x_ref,
               w_in1, b_in1, wd1, bd1, w11, b11, wo1, bo1,
               w_inR, b_inR, wdR, bdR, w1R, b1R, woR, boR,
               out_ref):
        masks = build_masks()
        x = x_ref[...].astype(jnp.float32)                                    # (dim, lanes)
        out = single_stage(x, masks, w_in1[...], b_in1[...], wd1[...], bd1[...],
                           w11[...], b11[...], wo1[...], bo1[...])
        out_ref[0] = out.astype(out_ref.dtype)

        if num_refine > 0:
            # Refinement stages via fori_loop over the stacked stage weights so
            # deep configs (e.g. 4 stages x 10 layers) don't fully unroll.
            def body(s, prev):
                o = single_stage(softmax_channels(prev), masks,
                                 w_inR[s], b_inR[s], wdR[s], bdR[s],
                                 w1R[s], b1R[s], woR[s], boR[s])
                out_ref[s + 1] = o.astype(out_ref.dtype)
                return o

            jax.lax.fori_loop(0, num_refine, body, out)

    return kernel


# ----------------------------------------------------------------------------
# Fused multi-stage forward (single pallas_call)
# ----------------------------------------------------------------------------
def multi_stage_forward(x_nct, kp1, kpR, *, num_layers, num_stages, causal_conv,
                        matmul_dtype=jnp.bfloat16, lane_target=1024):
    """x_nct: (N, dim, T) PyTorch NCT -> (num_stages, N, num_classes, T)."""
    assert num_stages >= 2, "fused kernel expects at least one refinement stage"
    N, dim, T = x_nct.shape
    f_maps = kp1[0].shape[0]
    n_cls = kp1[6].shape[0]

    # ---- lane-dense layout: pad T to a 128 multiple, fold batch into lanes ----
    t_pad = _round_up(T, LANE)
    if t_pad != T:
        x_nct = jnp.pad(x_nct, ((0, 0), (0, 0), (0, t_pad - T)))
    b_tile = 1
    for c in range(1, N + 1):                 # largest divisor of N within lane target
        if N % c == 0 and c * t_pad <= max(lane_target, t_pad):
            b_tile = c
    n_tiles = N // b_tile
    lanes = b_tile * t_pad
    # (N, dim, t_pad) -> (dim, N * t_pad): batch-major flattened lane axis.
    x_flat = jnp.transpose(x_nct, (1, 0, 2)).reshape(dim, N * t_pad)

    # ---- cast matmul weights once in the wrapper (halves resident weight VMEM);
    #      biases stay f32 ----
    def cast_weights(p):
        return tuple(w.astype(matmul_dtype) if i % 2 == 0 else w
                     for i, w in enumerate(p))
    kp1c = cast_weights(kp1)
    kpRc = cast_weights(kpR)
    params = list(kp1c) + list(kpRc)

    kernel = make_fused_kernel(
        num_layers=num_layers, num_stages=num_stages, causal_conv=causal_conv,
        f_maps=f_maps, seq_len=T, t_pad=t_pad, lanes=lanes,
        matmul_dtype=matmul_dtype)

    def const_spec(shape):
        zeros = (0,) * len(shape)
        # Same block every grid step -> weights stay resident in VMEM.
        # TODO(synk): pipeline_mode=pl.Buffered(1) would single-buffer these and
        # halve the resident weight footprint for big 4-stage x 10-layer configs.
        return pl.BlockSpec(shape, lambda b: zeros)

    # ---- generation-aware VMEM budget ----
    param_bytes = sum(int(p.size) * p.dtype.itemsize for p in params)
    n_masks = 2 * num_layers
    work_bytes = 4 * lanes * (2 * dim + 12 * f_maps + 3 * num_stages * n_cls
                              + n_masks * f_maps)
    try:
        vmem_cap = int(getattr(pltpu.get_tpu_info(), "vmem_capacity_bytes",
                               128 * 2**20))
    except Exception:
        vmem_cap = 128 * 2**20
    vmem_limit = int(min(int(0.85 * vmem_cap),
                         max(32 * 2**20, 2 * (param_bytes + work_bytes))))

    # TODO(synk): for very long sequences on v7x (64 MiB VMEM, 2 TCs) add a
    # time-tile grid axis with a 2*2**(num_layers-1) dilation halo so the
    # parallel grid has >= 2 steps even at N == 1.
    out_flat = pl.pallas_call(
        kernel,
        out_shape=jax.ShapeDtypeStruct((num_stages, n_cls, N * t_pad), jnp.float32),
        grid=(n_tiles,),
        in_specs=[pl.BlockSpec((dim, lanes), lambda b: (0, b))]
                 + [const_spec(p.shape) for p in params],
        out_specs=pl.BlockSpec((num_stages, n_cls, lanes), lambda b: (0, 0, b)),
        compiler_params=pltpu.CompilerParams(
            dimension_semantics=("parallel",),
            vmem_limit_bytes=vmem_limit),
    )(x_flat, *params)

    out = out_flat.reshape(num_stages, n_cls, N, t_pad)
    out = jnp.transpose(out, (0, 2, 1, 3))[:, :, :, :T]
    return out


# ----------------------------------------------------------------------------
# Parameters (deterministic init, PyTorch layout) + kernel layout conversion
# ----------------------------------------------------------------------------
def init_stage_params_torch(key, num_layers, num_f_maps, in_dim, num_classes):
    """PyTorch-layout params: conv weights (C_out, C_in, K), biases (C_out,)."""
    ks = jax.random.split(key, 6 + 4 * num_layers)
    i = 0
    scale = 0.1

    def nrm(k, shape):
        return (scale * jax.random.normal(k, shape)).astype(jnp.float32)

    w_in = nrm(ks[i], (num_f_maps, in_dim, 1)); i += 1
    b_in = nrm(ks[i], (num_f_maps,)); i += 1
    wds, bds, w1s, b1s = [], [], [], []
    for _ in range(num_layers):
        wds.append(nrm(ks[i], (num_f_maps, num_f_maps, 3))); i += 1
        bds.append(nrm(ks[i], (num_f_maps,))); i += 1
        w1s.append(nrm(ks[i], (num_f_maps, num_f_maps, 1))); i += 1
        b1s.append(nrm(ks[i], (num_f_maps,))); i += 1
    w_out = nrm(ks[i], (num_classes, num_f_maps, 1)); i += 1
    b_out = nrm(ks[i], (num_classes,)); i += 1
    return (w_in, b_in, wds, bds, w1s, b1s, w_out, b_out)


def torch_to_kernel_params(tp):
    """Convert to the (C_out, C_in) @ (C_in, lanes) layout used by the kernel."""
    w_in, b_in, wds, bds, w1s, b1s, w_out, b_out = tp
    k_w_in = w_in[:, :, 0]                                                   # (F, in_dim)
    k_b_in = b_in[:, None]                                                   # (F, 1)
    # stack the 3 taps along the contraction dim -> one K=3F matmul per layer
    k_wd = jnp.stack(
        [jnp.concatenate([w[:, :, k] for k in range(3)], axis=1) for w in wds],
        axis=0)                                                              # (L, F, 3F)
    k_bd = jnp.stack([b[:, None] for b in bds], axis=0)                      # (L, F, 1)
    k_w1 = jnp.stack([w[:, :, 0] for w in w1s], axis=0)                      # (L, F, F)
    k_b1 = jnp.stack([b[:, None] for b in b1s], axis=0)                      # (L, F, 1)
    k_w_out = w_out[:, :, 0]                                                 # (n_cls, F)
    k_b_out = b_out[:, None]                                                 # (n_cls, 1)
    return (k_w_in, k_b_in, k_wd, k_bd, k_w1, k_b1, k_w_out, k_b_out)


def stack_refine_params(kps):
    """Stack per-stage kernel params over a leading stage axis."""
    return tuple(jnp.stack(leaves, axis=0) for leaves in zip(*kps))


# ----------------------------------------------------------------------------
# Pure-JAX reference (lax conv, PyTorch NCT semantics) for verification
# ----------------------------------------------------------------------------
def ref_conv1d(x, w, b, dilation=1, padding=0):
    out = jax.lax.conv_general_dilated(
        x, w, window_strides=(1,), padding=[(padding, padding)],
        rhs_dilation=(dilation,), dimension_numbers=("NCH", "OIH", "NCH"))
    return out + b[None, :, None]


def ref_stage(x, tp, num_layers, causal_conv):
    w_in, b_in, wds, bds, w1s, b1s, w_out, b_out = tp
    out = ref_conv1d(x, w_in, b_in)
    for l in range(num_layers):
        d = 2 ** l
        if causal_conv:
            c = jax.nn.relu(ref_conv1d(out, wds[l], bds[l], dilation=d, padding=2 * d))
            c = c[:, :, : -(2 * d)]
        else:
            c = jax.nn.relu(ref_conv1d(out, wds[l], bds[l], dilation=d, padding=d))
        c = ref_conv1d(c, w1s[l], b1s[l])
        out = out + c
    return ref_conv1d(out, w_out, b_out)


def ref_multi_stage(x, tp1, tps, num_layers, causal_conv):
    out = ref_stage(x, tp1, num_layers, causal_conv)
    outs = [out]
    for tp in tps:
        out = ref_stage(jax.nn.softmax(out, axis=1), tp, num_layers, causal_conv)
        outs.append(out)
    return jnp.stack(outs, axis=0)


# ----------------------------------------------------------------------------
if __name__ == "__main__":
    # small, MS-TCN-like config
    num_stages, num_layers = 3, 3
    num_f_maps, dim, num_classes = 32, 4, 8
    N = 2

    key = jax.random.PRNGKey(0)
    kx, kp = jax.random.split(key)

    pkeys = jax.random.split(kp, num_stages)
    tp_stage1 = init_stage_params_torch(pkeys[0], num_layers, num_f_maps, dim, num_classes)
    tp_stages = [init_stage_params_torch(pkeys[s], num_layers, num_f_maps,
                                         num_classes, num_classes)
                 for s in range(1, num_stages)]
    kp1 = torch_to_kernel_params(tp_stage1)
    kpR = stack_refine_params([torch_to_kernel_params(tp) for tp in tp_stages])

    # (causal_conv, matmul dtype, T, tolerance)
    #  f32 path  -> exact softmax, tight parity with the lax-conv reference
    #  bf16 path -> MXU-native operands + approx-EUP softmax, looser tolerance
    configs = [
        (False, jnp.float32,  128, 1e-3),
        (True,  jnp.float32,  100, 1e-3),   # exercises T-padding + causal path
        (False, jnp.bfloat16, 128, 5e-2),
        (True,  jnp.bfloat16, 128, 5e-2),
    ]
    for causal_conv, mm_dtype, T, tol in configs:
        x = jax.random.normal(kx, (N, dim, T), dtype=jnp.float32)   # PyTorch NCT input
        out = multi_stage_forward(x, kp1, kpR, num_layers=num_layers,
                                  num_stages=num_stages, causal_conv=causal_conv,
                                  matmul_dtype=mm_dtype)
        out = jax.block_until_ready(out)

        ref = jax.block_until_ready(
            ref_multi_stage(x, tp_stage1, tp_stages, num_layers, causal_conv))

        assert out.shape == (num_stages, N, num_classes, T), out.shape
        err = float(jnp.max(jnp.abs(out - ref)))
        assert jnp.allclose(out, ref, rtol=tol, atol=tol), \
            (causal_conv, str(mm_dtype), T, err)

    print("KERNEL_OK")
</pallas_src>

<mosaic_0001>
module attributes {stable_mosaic.version = 11 : i64} {
  func.func @kernel(%arg0: i32, %arg1: memref<4x256xf32, #tpu.memory_space<vmem>>, %arg2: memref<32x4xf32, #tpu.memory_space<vmem>>, %arg3: memref<32x1xf32, #tpu.memory_space<vmem>>, %arg4: memref<3x32x96xf32, #tpu.memory_space<vmem>>, %arg5: memref<3x32x1xf32, #tpu.memory_space<vmem>>, %arg6: memref<3x32x32xf32, #tpu.memory_space<vmem>>, %arg7: memref<3x32x1xf32, #tpu.memory_space<vmem>>, %arg8: memref<8x32xf32, #tpu.memory_space<vmem>>, %arg9: memref<8x1xf32, #tpu.memory_space<vmem>>, %arg10: memref<2x32x8xf32, #tpu.memory_space<vmem>>, %arg11: memref<2x32x1xf32, #tpu.memory_space<vmem>>, %arg12: memref<2x3x32x96xf32, #tpu.memory_space<vmem>>, %arg13: memref<2x3x32x1xf32, #tpu.memory_space<vmem>>, %arg14: memref<2x3x32x32xf32, #tpu.memory_space<vmem>>, %arg15: memref<2x3x32x1xf32, #tpu.memory_space<vmem>>, %arg16: memref<2x8x32xf32, #tpu.memory_space<vmem>>, %arg17: memref<2x8x1xf32, #tpu.memory_space<vmem>>, %arg18: memref<3x8x256xf32, #tpu.memory_space<vmem>>) attributes {dimension_semantics = [#tpu.dimension_semantics<parallel>], iteration_bounds = array<i64: 1>, scalar_prefetch = 0 : i64, scratch_operands = 0 : i64, tpu.core_type = #tpu.core_type<tc>, window_params = [{transform_indices = @transform_0, window_bounds = array<i64: 4, 256>}, {pipeline_mode = #tpu.pipeline_mode<synchronous>, transform_indices = @transform_1, window_bounds = array<i64: 32, 4>}, {pipeline_mode = #tpu.pipeline_mode<synchronous>, transform_indices = @transform_2, window_bounds = array<i64: 32, 1>}, {pipeline_mode = #tpu.pipeline_mode<synchronous>, transform_indices = @transform_3, window_bounds = array<i64: 3, 32, 96>}, {pipeline_mode = #tpu.pipeline_mode<synchronous>, transform_indices = @transform_4, window_bounds = array<i64: 3, 32, 1>}, {pipeline_mode = #tpu.pipeline_mode<synchronous>, transform_indices = @transform_5, window_bounds = array<i64: 3, 32, 32>}, {pipeline_mode = #tpu.pipeline_mode<synchronous>, transform_indices = @transform_6, window_bounds = array<i64: 3, 32, 1>}, {pipeline_mode = #tpu.pipeline_mode<synchronous>, transform_indices = @transform_7, window_bounds = array<i64: 8, 32>}, {pipeline_mode = #tpu.pipeline_mode<synchronous>, transform_indices = @transform_8, window_bounds = array<i64: 8, 1>}, {pipeline_mode = #tpu.pipeline_mode<synchronous>, transform_indices = @transform_9, window_bounds = array<i64: 2, 32, 8>}, {pipeline_mode = #tpu.pipeline_mode<synchronous>, transform_indices = @transform_10, window_bounds = array<i64: 2, 32, 1>}, {pipeline_mode = #tpu.pipeline_mode<synchronous>, transform_indices = @transform_11, window_bounds = array<i64: 2, 3, 32, 96>}, {pipeline_mode = #tpu.pipeline_mode<synchronous>, transform_indices = @transform_12, window_bounds = array<i64: 2, 3, 32, 1>}, {pipeline_mode = #tpu.pipeline_mode<synchronous>, transform_indices = @transform_13, window_bounds = array<i64: 2, 3, 32, 32>}, {pipeline_mode = #tpu.pipeline_mode<synchronous>, transform_indices = @transform_14, window_bounds = array<i64: 2, 3, 32, 1>}, {pipeline_mode = #tpu.pipeline_mode<synchronous>, transform_indices = @transform_15, window_bounds = array<i64: 2, 8, 32>}, {pipeline_mode = #tpu.pipeline_mode<synchronous>, transform_indices = @transform_16, window_bounds = array<i64: 2, 8, 1>}, {transform_indices = @transform_17, window_bounds = array<i64: 3, 8, 256>}]} {
    %0 = tpu.iota {dimensions = array<i32: 1>} : vector<32x256xi32>
    %c128_i32 = arith.constant 128 : i32
    %c0_i32 = arith.constant 0 : i32
    %1 = arith.cmpi eq, %c128_i32, %c0_i32 : i32
    %c1_i32 = arith.constant 1 : i32
    %2 = arith.select %1, %c1_i32, %c128_i32 : i32
    %3 = vector.broadcast %2 : i32 to vector<32x256xi32>
    %4 = arith.remsi %0, %3 : vector<32x256xi32>
    %c0_i32_0 = arith.constant 0 : i32
    %5 = vector.broadcast %c0_i32_0 : i32 to vector<32x256xi32>
    %6 = arith.cmpi ne, %4, %5 : vector<32x256xi32>
    %c0_i32_1 = arith.constant 0 : i32
    %7 = vector.broadcast %c0_i32_1 : i32 to vector<32x256xi32>
    %8 = arith.cmpi slt, %4, %7 : vector<32x256xi32>
    %c0_i32_2 = arith.constant 0 : i32
    %9 = arith.cmpi slt, %2, %c0_i32_2 : i32
    %10 = vector.broadcast %9 : i1 to vector<32x256xi1>
    %11 = vector.broadcast %10 : vector<32x256xi1> to vector<32x256xi1>
    %12 = arith.xori %8, %11 : vector<32x256xi1>
    %13 = arith.andi %12, %6 : vector<32x256xi1>
    %14 = vector.broadcast %2 : i32 to vector<32x256xi32>
    %15 = arith.addi %4, %14 : vector<32x256xi32>
    %16 = arith.select %13, %15, %4 : vector<32x256xi1>, vector<32x256xi32>
    %c-1_i32 = arith.constant -1 : i32
    %17 = vector.broadcast %c-1_i32 : i32 to vector<32x256xi32>
    %18 = arith.addi %16, %17 : vector<32x256xi32>
    %c0_i32_3 = arith.constant 0 : i32
    %19 = vector.broadcast %c0_i32_3 : i32 to vector<32x256xi32>
    %20 = arith.cmpi sge, %18, %19 : vector<32x256xi32>
    %c-1_i32_4 = arith.constant -1 : i32
    %21 = vector.broadcast %c-1_i32_4 : i32 to vector<32x256xi32>
    %22 = arith.addi %16, %21 : vector<32x256xi32>
    %c128_i32_5 = arith.constant 128 : i32
    %23 = vector.broadcast %c128_i32_5 : i32 to vector<32x256xi32>
    %24 = arith.cmpi slt, %22, %23 : vector<32x256xi32>
    %25 = arith.andi %20, %24 : vector<32x256xi1>
    %c1_i32_6 = arith.constant 1 : i32
    %26 = vector.broadcast %c1_i32_6 : i32 to vector<32x256xi32>
    %27 = arith.addi %16, %26 : vector<32x256xi32>
    %c0_i32_7 = arith.constant 0 : i32
    %28 = vector.broadcast %c0_i32_7 : i32 to vector<32x256xi32>
    %29 = arith.cmpi sge, %27, %28 : vector<32x256xi32>
    %c1_i32_8 = arith.constant 1 : i32
    %30 = vector.broadcast %c1_i32_8 : i32 to vector<32x256xi32>
    %31 = arith.addi %16, %30 : vector<32x256xi32>
    %c128_i32_9 = arith.constant 128 : i32
    %32 = vector.broadcast %c128_i32_9 : i32 to vector<32x256xi32>
    %33 = arith.cmpi slt, %31, %32 : vector<32x256xi32>
    %34 = arith.andi %29, %33 : vector<32x256xi1>
    %c-2_i32 = arith.constant -2 : i32
    %35 = vector.broadcast %c-2_i32 : i32 to vector<32x256xi32>
    %36 = arith.addi %16, %35 : vector<32x256xi32>
    %c0_i32_10 = arith.constant 0 : i32
    %37 = vector.broadcast %c0_i32_10 : i32 to vector<32x256xi32>
    %38 = arith.cmpi sge, %36, %37 : vector<32x256xi32>
    %c-2_i32_11 = arith.constant -2 : i32
    %39 = vector.broadcast %c-2_i32_11 : i32 to vector<32x256xi32>
    %40 = arith.addi %16, %39 : vector<32x256xi32>
    %c128_i32_12 = arith.constant 128 : i32
    %41 = vector.broadcast %c128_i32_12 : i32 to vector<32x256xi32>
    %42 = arith.cmpi slt, %40, %41 : vector<32x256xi32>
    %43 = arith.andi %38, %42 : vector<32x256xi1>
    %c2_i32 = arith.constant 2 : i32
    %44 = vector.broadcast %c2_i32 : i32 to vector<32x256xi32>
    %45 = arith.addi %16, %44 : vector<32x256xi32>
    %c0_i32_13 = arith.constant 0 : i32
    %46 = vector.broadcast %c0_i32_13 : i32 to vector<32x256xi32>
    %47 = arith.cmpi sge, %45, %46 : vector<32x256xi32>
    %c2_i32_14 = arith.constant 2 : i32
    %48 = vector.broadcast %c2_i32_14 : i32 to vector<32x256xi32>
    %49 = arith.addi %16, %48 : vector<32x256xi32>
    %c128_i32_15 = arith.constant 128 : i32
    %50 = vector.broadcast %c128_i32_15 : i32 to vector<32x256xi32>
    %51 = arith.cmpi slt, %49, %50 : vector<32x256xi32>
    %52 = arith.andi %47, %51 : vector<32x256xi1>
    %c-4_i32 = arith.constant -4 : i32
    %53 = vector.broadcast %c-4_i32 : i32 to vector<32x256xi32>
    %54 = arith.addi %16, %53 : vector<32x256xi32>
    %c0_i32_16 = arith.constant 0 : i32
    %55 = vector.broadcast %c0_i32_16 : i32 to vector<32x256xi32>
    %56 = arith.cmpi sge, %54, %55 : vector<32x256xi32>
    %c-4_i32_17 = arith.constant -4 : i32
    %57 = vector.broadcast %c-4_i32_17 : i32 to vector<32x256xi32>
    %58 = arith.addi %16, %57 : vector<32x256xi32>
    %c128_i32_18 = arith.constant 128 : i32
    %59 = vector.broadcast %c128_i32_18 : i32 to vector<32x256xi32>
    %60 = arith.cmpi slt, %58, %59 : vector<32x256xi32>
    %61 = arith.andi %56, %60 : vector<32x256xi1>
    %c4_i32 = arith.constant 4 : i32
    %62 = vector.broadcast %c4_i32 : i32 to vector<32x256xi32>
    %63 = arith.addi %16, %62 : vector<32x256xi32>
    %c0_i32_19 = arith.constant 0 : i32
    %64 = vector.broadcast %c0_i32_19 : i32 to vector<32x256xi32>
    %65 = arith.cmpi sge, %63, %64 : vector<32x256xi32>
    %c4_i32_20 = arith.constant 4 : i32
    %66 = vector.broadcast %c4_i32_20 : i32 to vector<32x256xi32>
    %67 = arith.addi %16, %66 : vector<32x256xi32>
    %c128_i32_21 = arith.constant 128 : i32
    %68 = vector.broadcast %c128_i32_21 : i32 to vector<32x256xi32>
    %69 = arith.cmpi slt, %67, %68 : vector<32x256xi32>
    %70 = arith.andi %65, %69 : vector<32x256xi1>
    %c0 = arith.constant 0 : index
    %c0_22 = arith.constant 0 : index
    %71 = vector.load %arg1[%c0, %c0_22] : memref<4x256xf32, #tpu.memory_space<vmem>>, vector<4x256xf32>
    %c0_23 = arith.constant 0 : index
    %c0_24 = arith.constant 0 : index
    %72 = vector.load %arg2[%c0_23, %c0_24] : memref<32x4xf32, #tpu.memory_space<vmem>>, vector<32x4xf32>
    %c0_25 = arith.constant 0 : index
    %c0_26 = arith.constant 0 : index
    %73 = vector.load %arg3[%c0_25, %c0_26] : memref<32x1xf32, #tpu.memory_space<vmem>>, vector<32x1xf32>
    %c0_27 = arith.constant 0 : index
    %c0_28 = arith.constant 0 : index
    %c0_29 = arith.constant 0 : index
    %74 = vector.load %arg4[%c0_27, %c0_28, %c0_29] : memref<3x32x96xf32, #tpu.memory_space<vmem>>, vector<3x32x96xf32>
    %c0_30 = arith.constant 0 : index
    %c0_31 = arith.constant 0 : index
    %c0_32 = arith.constant 0 : index
    %75 = vector.load %arg5[%c0_30, %c0_31, %c0_32] : memref<3x32x1xf32, #tpu.memory_space<vmem>>, vector<3x32x1xf32>
    %c0_33 = arith.constant 0 : index
    %c0_34 = arith.constant 0 : index
    %c0_35 = arith.constant 0 : index
    %76 = vector.load %arg6[%c0_33, %c0_34, %c0_35] : memref<3x32x32xf32, #tpu.memory_space<vmem>>, vector<3x32x32xf32>
    %c0_36 = arith.constant 0 : index
    %c0_37 = arith.constant 0 : index
    %c0_38 = arith.constant 0 : index
    %77 = vector.load %arg7[%c0_36, %c0_37, %c0_38] : memref<3x32x1xf32, #tpu.memory_space<vmem>>, vector<3x32x1xf32>
    %c0_39 = arith.constant 0 : index
    %c0_40 = arith.constant 0 : index
    %78 = vector.load %arg8[%c0_39, %c0_40] : memref<8x32xf32, #tpu.memory_space<vmem>>, vector<8x32xf32>
    %c0_41 = arith.constant 0 : index
    %c0_42 = arith.constant 0 : index
    %79 = vector.load %arg9[%c0_41, %c0_42] : memref<8x1xf32, #tpu.memory_space<vmem>>, vector<8x1xf32>
    %cst = arith.constant dense<0.000000e+00> : vector<32x256xf32>
    %80 = tpu.matmul %72, %71, %cst {dimension_numbers = #tpu.dot_dimension_numbers<[1], [0], [0], [1], [0, 0, 1, 1], [], []>} : vector<32x4xf32>, vector<4x256xf32>, vector<32x256xf32> -> vector<32x256xf32>
    %81 = vector.broadcast %73 : vector<32x1xf32> to vector<32x256xf32>
    %82 = arith.addf %80, %81 : vector<32x256xf32>
    %c1_i32_43 = arith.constant 1 : i32
    %83 = tpu.dynamic_rotate %82 by %c1_i32_43 dim 1 : vector<32x256xf32>, i32 -> vector<32x256xf32>
    %cst_44 = arith.constant 0.000000e+00 : f32
    %84 = vector.broadcast %cst_44 : f32 to vector<32x256xf32>
    %85 = arith.select %25, %83, %84 : vector<32x256xi1>, vector<32x256xf32>
    %c255_i32 = arith.constant 255 : i32
    %86 = tpu.dynamic_rotate %82 by %c255_i32 dim 1 : vector<32x256xf32>, i32 -> vector<32x256xf32>
    %cst_45 = arith.constant 0.000000e+00 : f32
    %87 = vector.broadcast %cst_45 : f32 to vector<32x256xf32>
    %88 = arith.select %34, %86, %87 : vector<32x256xi1>, vector<32x256xf32>
    %89 = tpu.concatenate %85, %82, %88 in 0 : vector<32x256xf32>, vector<32x256xf32>, vector<32x256xf32> -> vector<96x256xf32>
    %90 = vector.extract_strided_slice %74 {offsets = [0, 0, 0], sizes = [1, 32, 96], strides = [1, 1, 1]} : vector<3x32x96xf32> to vector<1x32x96xf32>
    %91 = vector.shape_cast %90 : vector<1x32x96xf32> to vector<32x96xf32>
    %cst_46 = arith.constant dense<0.000000e+00> : vector<32x256xf32>
    %92 = tpu.matmul %91, %89, %cst_46 {dimension_numbers = #tpu.dot_dimension_numbers<[1], [0], [0], [1], [0, 0, 1, 1], [], []>} : vector<32x96xf32>, vector<96x256xf32>, vector<32x256xf32> -> vector<32x256xf32>
    %93 = vector.extract_strided_slice %75 {offsets = [0, 0, 0], sizes = [1, 32, 1], strides = [1, 1, 1]} : vector<3x32x1xf32> to vector<1x32x1xf32>
    %94 = vector.shape_cast %93 : vector<1x32x1xf32> to vector<32x1xf32>
    %95 = vector.broadcast %94 : vector<32x1xf32> to vector<32x256xf32>
    %96 = arith.addf %92, %95 : vector<32x256xf32>
    %cst_47 = arith.constant 0.000000e+00 : f32
    %97 = vector.broadcast %cst_47 : f32 to vector<32x256xf32>
    %98 = arith.maximumf %96, %97 : vector<32x256xf32>
    %99 = vector.extract_strided_slice %76 {offsets = [0, 0, 0], sizes = [1, 32, 32], strides = [1, 1, 1]} : vector<3x32x32xf32> to vector<1x32x32xf32>
    %100 = vector.shape_cast %99 : vector<1x32x32xf32> to vector<32x32xf32>
    %cst_48 = arith.constant dense<0.000000e+00> : vector<32x256xf32>
    %101 = tpu.matmul %100, %98, %cst_48 {dimension_numbers = #tpu.dot_dimension_numbers<[1], [0], [0], [1], [0, 0, 1, 1], [], []>} : vector<32x32xf32>, vector<32x256xf32>, vector<32x256xf32> -> vector<32x256xf32>
    %102 = vector.extract_strided_slice %77 {offsets = [0, 0, 0], sizes = [1, 32, 1], strides = [1, 1, 1]} : vector<3x32x1xf32> to vector<1x32x1xf32>
    %103 = vector.shape_cast %102 : vector<1x32x1xf32> to vector<32x1xf32>
    %104 = vector.broadcast %103 : vector<32x1xf32> to vector<32x256xf32>
    %105 = arith.addf %101, %104 : vector<32x256xf32>
    %106 = arith.addf %82, %105 : vector<32x256xf32>
    %c2_i32_49 = arith.constant 2 : i32
    %107 = tpu.dynamic_rotate %106 by %c2_i32_49 dim 1 : vector<32x256xf32>, i32 -> vector<32x256xf32>
    %cst_50 = arith.constant 0.000000e+00 : f32
    %108 = vector.broadcast %cst_50 : f32 to vector<32x256xf32>
    %109 = arith.select %43, %107, %108 : vector<32x256xi1>, vector<32x256xf32>
    %c254_i32 = arith.constant 254 : i32
    %110 = tpu.dynamic_rotate %106 by %c254_i32 dim 1 : vector<32x256xf32>, i32 -> vector<32x256xf32>
    %cst_51 = arith.constant 0.000000e+00 : f32
    %111 = vector.broadcast %cst_51 : f32 to vector<32x256xf32>
    %112 = arith.select %52, %110, %111 : vector<32x256xi1>, vector<32x256xf32>
    %113 = tpu.concatenate %109, %106, %112 in 0 : vector<32x256xf32>, vector<32x256xf32>, vector<32x256xf32> -> vector<96x256xf32>
    %114 = vector.extract_strided_slice %74 {offsets = [1, 0, 0], sizes = [1, 32, 96], strides = [1, 1, 1]} : vector<3x32x96xf32> to vector<1x32x96xf32>
    %115 = vector.shape_cast %114 : vector<1x32x96xf32> to vector<32x96xf32>
    %cst_52 = arith.constant dense<0.000000e+00> : vector<32x256xf32>
    %116 = tpu.matmul %115, %113, %cst_52 {dimension_numbers = #tpu.dot_dimension_numbers<[1], [0], [0], [1], [0, 0, 1, 1], [], []>} : vector<32x96xf32>, vector<96x256xf32>, vector<32x256xf32> -> vector<32x256xf32>
    %117 = vector.extract_strided_slice %75 {offsets = [1, 0, 0], sizes = [1, 32, 1], strides = [1, 1, 1]} : vector<3x32x1xf32> to vector<1x32x1xf32>
    %118 = vector.shape_cast %117 : vector<1x32x1xf32> to vector<32x1xf32>
    %119 = vector.broadcast %118 : vector<32x1xf32> to vector<32x256xf32>
    %120 = arith.addf %116, %119 : vector<32x256xf32>
    %cst_53 = arith.constant 0.000000e+00 : f32
    %121 = vector.broadcast %cst_53 : f32 to vector<32x256xf32>
    %122 = arith.maximumf %120, %121 : vector<32x256xf32>
    %123 = vector.extract_strided_slice %76 {offsets = [1, 0, 0], sizes = [1, 32, 32], strides = [1, 1, 1]} : vector<3x32x32xf32> to vector<1x32x32xf32>
    %124 = vector.shape_cast %123 : vector<1x32x32xf32> to vector<32x32xf32>
    %cst_54 = arith.constant dense<0.000000e+00> : vector<32x256xf32>
    %125 = tpu.matmul %124, %122, %cst_54 {dimension_numbers = #tpu.dot_dimension_numbers<[1], [0], [0], [1], [0, 0, 1, 1], [], []>} : vector<32x32xf32>, vector<32x256xf32>, vector<32x256xf32> -> vector<32x256xf32>
    %126 = vector.extract_strided_slice %77 {offsets = [1, 0, 0], sizes = [1, 32, 1], strides = [1, 1, 1]} : vector<3x32x1xf32> to vector<1x32x1xf32>
    %127 = vector.shape_cast %126 : vector<1x32x1xf32> to vector<32x1xf32>
    %128 = vector.broadcast %127 : vector<32x1xf32> to vector<32x256xf32>
    %129 = arith.addf %125, %128 : vector<32x256xf32>
    %130 = arith.addf %106, %129 : vector<32x256xf32>
    %c4_i32_55 = arith.constant 4 : i32
    %131 = tpu.dynamic_rotate %130 by %c4_i32_55 dim 1 : vector<32x256xf32>, i32 -> vector<32x256xf32>
    %cst_56 = arith.constant 0.000000e+00 : f32
    %132 = vector.broadcast %cst_56 : f32 to vector<32x256xf32>
    %133 = arith.select %61, %131, %132 : vector<32x256xi1>, vector<32x256xf32>
    %c252_i32 = arith.constant 252 : i32
    %134 = tpu.dynamic_rotate %130 by %c252_i32 dim 1 : vector<32x256xf32>, i32 -> vector<32x256xf32>
    %cst_57 = arith.constant 0.000000e+00 : f32
    %135 = vector.broadcast %cst_57 : f32 to vector<32x256xf32>
    %136 = arith.select %70, %134, %135 : vector<32x256xi1>, vector<32x256xf32>
    %137 = tpu.concatenate %133, %130, %136 in 0 : vector<32x256xf32>, vector<32x256xf32>, vector<32x256xf32> -> vector<96x256xf32>
    %138 = vector.extract_strided_slice %74 {offsets = [2, 0, 0], sizes = [1, 32, 96], strides = [1, 1, 1]} : vector<3x32x96xf32> to vector<1x32x96xf32>
    %139 = vector.shape_cast %138 : vector<1x32x96xf32> to vector<32x96xf32>
    %cst_58 = arith.constant dense<0.000000e+00> : vector<32x256xf32>
    %140 = tpu.matmul %139, %137, %cst_58 {dimension_numbers = #tpu.dot_dimension_numbers<[1], [0], [0], [1], [0, 0, 1, 1], [], []>} : vector<32x96xf32>, vector<96x256xf32>, vector<32x256xf32> -> vector<32x256xf32>
    %141 = vector.extract_strided_slice %75 {offsets = [2, 0, 0], sizes = [1, 32, 1], strides = [1, 1, 1]} : vector<3x32x1xf32> to vector<1x32x1xf32>
    %142 = vector.shape_cast %141 : vector<1x32x1xf32> to vector<32x1xf32>
    %143 = vector.broadcast %142 : vector<32x1xf32> to vector<32x256xf32>
    %144 = arith.addf %140, %143 : vector<32x256xf32>
    %cst_59 = arith.constant 0.000000e+00 : f32
    %145 = vector.broadcast %cst_59 : f32 to vector<32x256xf32>
    %146 = arith.maximumf %144, %145 : vector<32x256xf32>
    %147 = vector.extract_strided_slice %76 {offsets = [2, 0, 0], sizes = [1, 32, 32], strides = [1, 1, 1]} : vector<3x32x32xf32> to vector<1x32x32xf32>
    %148 = vector.shape_cast %147 : vector<1x32x32xf32> to vector<32x32xf32>
    %cst_60 = arith.constant dense<0.000000e+00> : vector<32x256xf32>
    %149 = tpu.matmul %148, %146, %cst_60 {dimension_numbers = #tpu.dot_dimension_numbers<[1], [0], [0], [1], [0, 0, 1, 1], [], []>} : vector<32x32xf32>, vector<32x256xf32>, vector<32x256xf32> -> vector<32x256xf32>
    %150 = vector.extract_strided_slice %77 {offsets = [2, 0, 0], sizes = [1, 32, 1], strides = [1, 1, 1]} : vector<3x32x1xf32> to vector<1x32x1xf32>
    %151 = vector.shape_cast %150 : vector<1x32x1xf32> to vector<32x1xf32>
    %152 = vector.broadcast %151 : vector<32x1xf32> to vector<32x256xf32>
    %153 = arith.addf %149, %152 : vector<32x256xf32>
    %154 = arith.addf %130, %153 : vector<32x256xf32>
    %cst_61 = arith.constant dense<0.000000e+00> : vector<8x256xf32>
    %155 = tpu.matmul %78, %154, %cst_61 {dimension_numbers = #tpu.dot_dimension_numbers<[1], [0], [0], [1], [0, 0, 1, 1], [], []>} : vector<8x32xf32>, vector<32x256xf32>, vector<8x256xf32> -> vector<8x256xf32>
    %156 = vector.broadcast %79 : vector<8x1xf32> to vector<8x256xf32>
    %157 = arith.addf %155, %156 : vector<8x256xf32>
    %c0_62 = arith.constant 0 : index
    %c0_63 = arith.constant 0 : index
    %c0_64 = arith.constant 0 : index
    %158 = vector.load %arg18[%c0_62, %c0_63, %c0_64] : memref<3x8x256xf32, #tpu.memory_space<vmem>>, vector<1x8x256xf32>
    %159 = vector.shape_cast %158 : vector<1x8x256xf32> to vector<8x256xf32>
    %160 = vector.shape_cast %157 : vector<8x256xf32> to vector<1x8x256xf32>
    tpu.vector_store %arg18[%c0_62, %c0_63, %c0_64], %160 {strides = array<i32>} : memref<3x8x256xf32, #tpu.memory_space<vmem>>, vector<1x8x256xf32>,
    %c0_i32_65 = arith.constant 0 : i32
    %c2_i32_66 = arith.constant 2 : i32
    %161 = arith.addi %c0_i32_65, %c2_i32_66 : i32
    %c1_i32_67 = arith.constant 1 : i32
    %162 = scf.for %arg19 = %c0_i32_65 to %161 step %c1_i32_67 iter_args(%arg20 = %157) -> (vector<8x256xf32>)  : i32 {
      %cst_69 = arith.constant dense<0xFF800000> : vector<256xf32>
      %163 = vector.multi_reduction <maximumf>, %arg20, %cst_69 [0] : vector<8x256xf32> to vector<256xf32>
      %164 = vector.shape_cast %163 : vector<256xf32> to vector<1x256xf32>
      %165 = vector.broadcast %164 : vector<1x256xf32> to vector<8x256xf32>
      %166 = arith.subf %arg20, %165 : vector<8x256xf32>
      %167 = math.exp %166 : vector<8x256xf32>
      %cst_70 = arith.constant dense<0.000000e+00> : vector<256xf32>
      %168 = vector.multi_reduction <add>, %167, %cst_70 [0] : vector<8x256xf32> to vector<256xf32>
      %169 = vector.shape_cast %168 : vector<256xf32> to vector<1x256xf32>
      %170 = vector.broadcast %169 : vector<1x256xf32> to vector<8x256xf32>
      %171 = arith.divf %167, %170 : vector<8x256xf32>
      %172 = arith.index_cast %arg19 : i32 to index
      %c0_71 = arith.constant 0 : index
      %c0_72 = arith.constant 0 : index
      %173 = vector.load %arg10[%172, %c0_71, %c0_72] : memref<2x32x8xf32, #tpu.memory_space<vmem>>, vector<1x32x8xf32>
      %174 = vector.shape_cast %173 : vector<1x32x8xf32> to vector<32x8xf32>
      %175 = arith.index_cast %arg19 : i32 to index
      %c0_73 = arith.constant 0 : index
      %c0_74 = arith.constant 0 : index
      %176 = vector.load %arg11[%175, %c0_73, %c0_74] : memref<2x32x1xf32, #tpu.memory_space<vmem>>, vector<1x32x1xf32>
      %177 = vector.shape_cast %176 : vector<1x32x1xf32> to vector<32x1xf32>
      %178 = arith.index_cast %arg19 : i32 to index
      %c0_75 = arith.constant 0 : index
      %c0_76 = arith.constant 0 : index
      %c0_77 = arith.constant 0 : index
      %179 = vector.load %arg12[%178, %c0_75, %c0_76, %c0_77] : memref<2x3x32x96xf32, #tpu.memory_space<vmem>>, vector<1x3x32x96xf32>
      %180 = vector.shape_cast %179 : vector<1x3x32x96xf32> to vector<3x32x96xf32>
      %181 = arith.index_cast %arg19 : i32 to index
      %c0_78 = arith.constant 0 : index
      %c0_79 = arith.constant 0 : index
      %c0_80 = arith.constant 0 : index
      %182 = vector.load %arg13[%181, %c0_78, %c0_79, %c0_80] : memref<2x3x32x1xf32, #tpu.memory_space<vmem>>, vector<1x3x32x1xf32>
      %183 = vector.shape_cast %182 : vector<1x3x32x1xf32> to vector<3x32x1xf32>
      %184 = arith.index_cast %arg19 : i32 to index
      %c0_81 = arith.constant 0 : index
      %c0_82 = arith.constant 0 : index
      %c0_83 = arith.constant 0 : index
      %185 = vector.load %arg14[%184, %c0_81, %c0_82, %c0_83] : memref<2x3x32x32xf32, #tpu.memory_space<vmem>>, vector<1x3x32x32xf32>
      %186 = vector.shape_cast %185 : vector<1x3x32x32xf32> to vector<3x32x32xf32>
      %187 = arith.index_cast %arg19 : i32 to index
      %c0_84 = arith.constant 0 : index
      %c0_85 = arith.constant 0 : index
      %c0_86 = arith.constant 0 : index
      %188 = vector.load %arg15[%187, %c0_84, %c0_85, %c0_86] : memref<2x3x32x1xf32, #tpu.memory_space<vmem>>, vector<1x3x32x1xf32>
      %189 = vector.shape_cast %188 : vector<1x3x32x1xf32> to vector<3x32x1xf32>
      %190 = arith.index_cast %arg19 : i32 to index
      %c0_87 = arith.constant 0 : index
      %c0_88 = arith.constant 0 : index
      %191 = vector.load %arg16[%190, %c0_87, %c0_88] : memref<2x8x32xf32, #tpu.memory_space<vmem>>, vector<1x8x32xf32>
      %192 = vector.shape_cast %191 : vector<1x8x32xf32> to vector<8x32xf32>
      %193 = arith.index_cast %arg19 : i32 to index
      %c0_89 = arith.constant 0 : index
      %c0_90 = arith.constant 0 : index
      %194 = vector.load %arg17[%193, %c0_89, %c0_90] : memref<2x8x1xf32, #tpu.memory_space<vmem>>, vector<1x8x1xf32>
      %195 = vector.shape_cast %194 : vector<1x8x1xf32> to vector<8x1xf32>
      %cst_91 = arith.constant dense<0.000000e+00> : vector<32x256xf32>
      %196 = tpu.matmul %174, %171, %cst_91 {dimension_numbers = #tpu.dot_dimension_numbers<[1], [0], [0], [1], [0, 0, 1, 1], [], []>} : vector<32x8xf32>, vector<8x256xf32>, vector<32x256xf32> -> vector<32x256xf32>
      %197 = vector.broadcast %177 : vector<32x1xf32> to vector<32x256xf32>
      %198 = arith.addf %196, %197 : vector<32x256xf32>
      %c1_i32_92 = arith.constant 1 : i32
      %199 = tpu.dynamic_rotate %198 by %c1_i32_92 dim 1 : vector<32x256xf32>, i32 -> vector<32x256xf32>
      %cst_93 = arith.constant 0.000000e+00 : f32
      %200 = vector.broadcast %cst_93 : f32 to vector<32x256xf32>
      %201 = arith.select %25, %199, %200 : vector<32x256xi1>, vector<32x256xf32>
      %c255_i32_94 = arith.constant 255 : i32
      %202 = tpu.dynamic_rotate %198 by %c255_i32_94 dim 1 : vector<32x256xf32>, i32 -> vector<32x256xf32>
      %cst_95 = arith.constant 0.000000e+00 : f32
      %203 = vector.broadcast %cst_95 : f32 to vector<32x256xf32>
      %204 = arith.select %34, %202, %203 : vector<32x256xi1>, vector<32x256xf32>
      %205 = tpu.concatenate %201, %198, %204 in 0 : vector<32x256xf32>, vector<32x256xf32>, vector<32x256xf32> -> vector<96x256xf32>
      %206 = vector.extract_strided_slice %180 {offsets = [0, 0, 0], sizes = [1, 32, 96], strides = [1, 1, 1]} : vector<3x32x96xf32> to vector<1x32x96xf32>
      %207 = vector.shape_cast %206 : vector<1x32x96xf32> to vector<32x96xf32>
      %cst_96 = arith.constant dense<0.000000e+00> : vector<32x256xf32>
      %208 = tpu.matmul %207, %205, %cst_96 {dimension_numbers = #tpu.dot_dimension_numbers<[1], [0], [0], [1], [0, 0, 1, 1], [], []>} : vector<32x96xf32>, vector<96x256xf32>, vector<32x256xf32> -> vector<32x256xf32>
      %209 = vector.extract_strided_slice %183 {offsets = [0, 0, 0], sizes = [1, 32, 1], strides = [1, 1, 1]} : vector<3x32x1xf32> to vector<1x32x1xf32>
      %210 = vector.shape_cast %209 : vector<1x32x1xf32> to vector<32x1xf32>
      %211 = vector.broadcast %210 : vector<32x1xf32> to vector<32x256xf32>
      %212 = arith.addf %208, %211 : vector<32x256xf32>
      %cst_97 = arith.constant 0.000000e+00 : f32
      %213 = vector.broadcast %cst_97 : f32 to vector<32x256xf32>
      %214 = arith.maximumf %212, %213 : vector<32x256xf32>
      %215 = vector.extract_strided_slice %186 {offsets = [0, 0, 0], sizes = [1, 32, 32], strides = [1, 1, 1]} : vector<3x32x32xf32> to vector<1x32x32xf32>
      %216 = vector.shape_cast %215 : vector<1x32x32xf32> to vector<32x32xf32>
      %cst_98 = arith.constant dense<0.000000e+00> : vector<32x256xf32>
      %217 = tpu.matmul %216, %214, %cst_98 {dimension_numbers = #tpu.dot_dimension_numbers<[1], [0], [0], [1], [0, 0, 1, 1], [], []>} : vector<32x32xf32>, vector<32x256xf32>, vector<32x256xf32> -> vector<32x256xf32>
      %218 = vector.extract_strided_slice %189 {offsets = [0, 0, 0], sizes = [1, 32, 1], strides = [1, 1, 1]} : vector<3x32x1xf32> to vector<1x32x1xf32>
      %219 = vector.shape_cast %218 : vector<1x32x1xf32> to vector<32x1xf32>
      %220 = vector.broadcast %219 : vector<32x1xf32> to vector<32x256xf32>
      %221 = arith.addf %217, %220 : vector<32x256xf32>
      %222 = arith.addf %198, %221 : vector<32x256xf32>
      %c2_i32_99 = arith.constant 2 : i32
      %223 = tpu.dynamic_rotate %222 by %c2_i32_99 dim 1 : vector<32x256xf32>, i32 -> vector<32x256xf32>
      %cst_100 = arith.constant 0.000000e+00 : f32
      %224 = vector.broadcast %cst_100 : f32 to vector<32x256xf32>
      %225 = arith.select %43, %223, %224 : vector<32x256xi1>, vector<32x256xf32>
      %c254_i32_101 = arith.constant 254 : i32
      %226 = tpu.dynamic_rotate %222 by %c254_i32_101 dim 1 : vector<32x256xf32>, i32 -> vector<32x256xf32>
      %cst_102 = arith.constant 0.000000e+00 : f32
      %227 = vector.broadcast %cst_102 : f32 to vector<32x256xf32>
      %228 = arith.select %52, %226, %227 : vector<32x256xi1>, vector<32x256xf32>
      %229 = tpu.concatenate %225, %222, %228 in 0 : vector<32x256xf32>, vector<32x256xf32>, vector<32x256xf32> -> vector<96x256xf32>
      %230 = vector.extract_strided_slice %180 {offsets = [1, 0, 0], sizes = [1, 32, 96], strides = [1, 1, 1]} : vector<3x32x96xf32> to vector<1x32x96xf32>
      %231 = vector.shape_cast %230 : vector<1x32x96xf32> to vector<32x96xf32>
      %cst_103 = arith.constant dense<0.000000e+00> : vector<32x256xf32>
      %232 = tpu.matmul %231, %229, %cst_103 {dimension_numbers = #tpu.dot_dimension_numbers<[1], [0], [0], [1], [0, 0, 1, 1], [], []>} : vector<32x96xf32>, vector<96x256xf32>, vector<32x256xf32> -> vector<32x256xf32>
      %233 = vector.extract_strided_slice %183 {offsets = [1, 0, 0], sizes = [1, 32, 1], strides = [1, 1, 1]} : vector<3x32x1xf32> to vector<1x32x1xf32>
      %234 = vector.shape_cast %233 : vector<1x32x1xf32> to vector<32x1xf32>
      %235 = vector.broadcast %234 : vector<32x1xf32> to vector<32x256xf32>
      %236 = arith.addf %232, %235 : vector<32x256xf32>
      %cst_104 = arith.constant 0.000000e+00 : f32
      %237 = vector.broadcast %cst_104 : f32 to vector<32x256xf32>
      %238 = arith.maximumf %236, %237 : vector<32x256xf32>
      %239 = vector.extract_strided_slice %186 {offsets = [1, 0, 0], sizes = [1, 32, 32], strides = [1, 1, 1]} : vector<3x32x32xf32> to vector<1x32x32xf32>
      %240 = vector.shape_cast %239 : vector<1x32x32xf32> to vector<32x32xf32>
      %cst_105 = arith.constant dense<0.000000e+00> : vector<32x256xf32>
      %241 = tpu.matmul %240, %238, %cst_105 {dimension_numbers = #tpu.dot_dimension_numbers<[1], [0], [0], [1], [0, 0, 1, 1], [], []>} : vector<32x32xf32>, vector<32x256xf32>, vector<32x256xf32> -> vector<32x256xf32>
      %242 = vector.extract_strided_slice %189 {offsets = [1, 0, 0], sizes = [1, 32, 1], strides = [1, 1, 1]} : vector<3x32x1xf32> to vector<1x32x1xf32>
      %243 = vector.shape_cast %242 : vector<1x32x1xf32> to vector<32x1xf32>
      %244 = vector.broadcast %243 : vector<32x1xf32> to vector<32x256xf32>
      %245 = arith.addf %241, %244 : vector<32x256xf32>
      %246 = arith.addf %222, %245 : vector<32x256xf32>
      %c4_i32_106 = arith.constant 4 : i32
      %247 = tpu.dynamic_rotate %246 by %c4_i32_106 dim 1 : vector<32x256xf32>, i32 -> vector<32x256xf32>
      %cst_107 = arith.constant 0.000000e+00 : f32
      %248 = vector.broadcast %cst_107 : f32 to vector<32x256xf32>
      %249 = arith.select %61, %247, %248 : vector<32x256xi1>, vector<32x256xf32>
      %c252_i32_108 = arith.constant 252 : i32
      %250 = tpu.dynamic_rotate %246 by %c252_i32_108 dim 1 : vector<32x256xf32>, i32 -> vector<32x256xf32>
      %cst_109 = arith.constant 0.000000e+00 : f32
      %251 = vector.broadcast %cst_109 : f32 to vector<32x256xf32>
      %252 = arith.select %70, %250, %251 : vector<32x256xi1>, vector<32x256xf32>
      %253 = tpu.concatenate %249, %246, %252 in 0 : vector<32x256xf32>, vector<32x256xf32>, vector<32x256xf32> -> vector<96x256xf32>
      %254 = vector.extract_strided_slice %180 {offsets = [2, 0, 0], sizes = [1, 32, 96], strides = [1, 1, 1]} : vector<3x32x96xf32> to vector<1x32x96xf32>
      %255 = vector.shape_cast %254 : vector<1x32x96xf32> to vector<32x96xf32>
      %cst_110 = arith.constant dense<0.000000e+00> : vector<32x256xf32>
      %256 = tpu.matmul %255, %253, %cst_110 {dimension_numbers = #tpu.dot_dimension_numbers<[1], [0], [0], [1], [0, 0, 1, 1], [], []>} : vector<32x96xf32>, vector<96x256xf32>, vector<32x256xf32> -> vector<32x256xf32>
      %257 = vector.extract_strided_slice %183 {offsets = [2, 0, 0], sizes = [1, 32, 1], strides = [1, 1, 1]} : vector<3x32x1xf32> to vector<1x32x1xf32>
      %258 = vector.shape_cast %257 : vector<1x32x1xf32> to vector<32x1xf32>
      %259 = vector.broadcast %258 : vector<32x1xf32> to vector<32x256xf32>
      %260 = arith.addf %256, %259 : vector<32x256xf32>
      %cst_111 = arith.constant 0.000000e+00 : f32
      %261 = vector.broadcast %cst_111 : f32 to vector<32x256xf32>
      %262 = arith.maximumf %260, %261 : vector<32x256xf32>
      %263 = vector.extract_strided_slice %186 {offsets = [2, 0, 0], sizes = [1, 32, 32], strides = [1, 1, 1]} : vector<3x32x32xf32> to vector<1x32x32xf32>
      %264 = vector.shape_cast %263 : vector<1x32x32xf32> to vector<32x32xf32>
      %cst_112 = arith.constant dense<0.000000e+00> : vector<32x256xf32>
      %265 = tpu.matmul %264, %262, %cst_112 {dimension_numbers = #tpu.dot_dimension_numbers<[1], [0], [0], [1], [0, 0, 1, 1], [], []>} : vector<32x32xf32>, vector<32x256xf32>, vector<32x256xf32> -> vector<32x256xf32>
      %266 = vector.extract_strided_slice %189 {offsets = [2, 0, 0], sizes = [1, 32, 1], strides = [1, 1, 1]} : vector<3x32x1xf32> to vector<1x32x1xf32>
      %267 = vector.shape_cast %266 : vector<1x32x1xf32> to vector<32x1xf32>
      %268 = vector.broadcast %267 : vector<32x1xf32> to vector<32x256xf32>
      %269 = arith.addf %265, %268 : vector<32x256xf32>
      %270 = arith.addf %246, %269 : vector<32x256xf32>
      %cst_113 = arith.constant dense<0.000000e+00> : vector<8x256xf32>
      %271 = tpu.matmul %192, %270, %cst_113 {dimension_numbers = #tpu.dot_dimension_numbers<[1], [0], [0], [1], [0, 0, 1, 1], [], []>} : vector<8x32xf32>, vector<32x256xf32>, vector<8x256xf32> -> vector<8x256xf32>
      %272 = vector.broadcast %195 : vector<8x1xf32> to vector<8x256xf32>
      %273 = arith.addf %271, %272 : vector<8x256xf32>
      %c1_i32_114 = arith.constant 1 : i32
      %274 = arith.addi %arg19, %c1_i32_114 : i32
      %275 = arith.index_cast %274 : i32 to index
      %c0_115 = arith.constant 0 : index
      %c0_116 = arith.constant 0 : index
      %276 = vector.load %arg18[%275, %c0_115, %c0_116] : memref<3x8x256xf32, #tpu.memory_space<vmem>>, vector<1x8x256xf32>
      %277 = vector.shape_cast %276 : vector<1x8x256xf32> to vector<8x256xf32>
      %278 = vector.shape_cast %273 : vector<8x256xf32> to vector<1x8x256xf32>
      tpu.vector_store %arg18[%275, %c0_115, %c0_116], %278 {strides = array<i32>} : memref<3x8x256xf32, #tpu.memory_space<vmem>>, vector<1x8x256xf32>,
      scf.yield %273 : vector<8x256xf32>
    }
    %c2_i32_68 = arith.constant 2 : i32
    return
  }
  func.func @transform_0(%arg0: i32) -> (i32, i32) {
    %c0_i32 = arith.constant 0 : i32
    %c0_i32_0 = arith.constant 0 : i32
    return %c0_i32, %arg0 : i32, i32
  }
  func.func @transform_1(%arg0: i32) -> (i32, i32) {
    %c0_i32 = arith.constant 0 : i32
    %c0_i32_0 = arith.constant 0 : i32
    %c0_i32_1 = arith.constant 0 : i32
    return %c0_i32, %c0_i32_0 : i32, i32
  }
  func.func @transform_2(%arg0: i32) -> (i32, i32) {
    %c0_i32 = arith.constant 0 : i32
    %c0_i32_0 = arith.constant 0 : i32
    %c0_i32_1 = arith.constant 0 : i32
    return %c0_i32, %c0_i32_0 : i32, i32
  }
  func.func @transform_3(%arg0: i32) -> (i32, i32, i32) {
    %c0_i32 = arith.constant 0 : i32
    %c0_i32_0 = arith.constant 0 : i32
    %c0_i32_1 = arith.constant 0 : i32
    %c0_i32_2 = arith.constant 0 : i32
    return %c0_i32, %c0_i32_0, %c0_i32_1 : i32, i32, i32
  }
  func.func @transform_4(%arg0: i32) -> (i32, i32, i32) {
    %c0_i32 = arith.constant 0 : i32
    %c0_i32_0 = arith.constant 0 : i32
    %c0_i32_1 = arith.constant 0 : i32
    %c0_i32_2 = arith.constant 0 : i32
    return %c0_i32, %c0_i32_0, %c0_i32_1 : i32, i32, i32
  }
  func.func @transform_5(%arg0: i32) -> (i32, i32, i32) {
    %c0_i32 = arith.constant 0 : i32
    %c0_i32_0 = arith.constant 0 : i32
    %c0_i32_1 = arith.constant 0 : i32
    %c0_i32_2 = arith.constant 0 : i32
    return %c0_i32, %c0_i32_0, %c0_i32_1 : i32, i32, i32
  }
  func.func @transform_6(%arg0: i32) -> (i32, i32, i32) {
    %c0_i32 = arith.constant 0 : i32
    %c0_i32_0 = arith.constant 0 : i32
    %c0_i32_1 = arith.constant 0 : i32
    %c0_i32_2 = arith.constant 0 : i32
    return %c0_i32, %c0_i32_0, %c0_i32_1 : i32, i32, i32
  }
  func.func @transform_7(%arg0: i32) -> (i32, i32) {
    %c0_i32 = arith.constant 0 : i32
    %c0_i32_0 = arith.constant 0 : i32
    %c0_i32_1 = arith.constant 0 : i32
    return %c0_i32, %c0_i32_0 : i32, i32
  }
  func.func @transform_8(%arg0: i32) -> (i32, i32) {
    %c0_i32 = arith.constant 0 : i32
    %c0_i32_0 = arith.constant 0 : i32
    %c0_i32_1 = arith.constant 0 : i32
    return %c0_i32, %c0_i32_0 : i32, i32
  }
  func.func @transform_9(%arg0: i32) -> (i32, i32, i32) {
    %c0_i32 = arith.constant 0 : i32
    %c0_i32_0 = arith.constant 0 : i32
    %c0_i32_1 = arith.constant 0 : i32
    %c0_i32_2 = arith.constant 0 : i32
    return %c0_i32, %c0_i32_0, %c0_i32_1 : i32, i32, i32
  }
  func.func @transform_10(%arg0: i32) -> (i32, i32, i32) {
    %c0_i32 = arith.constant 0 : i32
    %c0_i32_0 = arith.constant 0 : i32
    %c0_i32_1 = arith.constant 0 : i32
    %c0_i32_2 = arith.constant 0 : i32
    return %c0_i32, %c0_i32_0, %c0_i32_1 : i32, i32, i32
  }
  func.func @transform_11(%arg0: i32) -> (i32, i32, i32, i32) {
    %c0_i32 = arith.constant 0 : i32
    %c0_i32_0 = arith.constant 0 : i32
    %c0_i32_1 = arith.constant 0 : i32
    %c0_i32_2 = arith.constant 0 : i32
    %c0_i32_3 = arith.constant 0 : i32
    return %c0_i32, %c0_i32_0, %c0_i32_1, %c0_i32_2 : i32, i32, i32, i32
  }
  func.func @transform_12(%arg0: i32) -> (i32, i32, i32, i32) {
    %c0_i32 = arith.constant 0 : i32
    %c0_i32_0 = arith.constant 0 : i32
    %c0_i32_1 = arith.constant 0 : i32
    %c0_i32_2 = arith.constant 0 : i32
    %c0_i32_3 = arith.constant 0 : i32
    return %c0_i32, %c0_i32_0, %c0_i32_1, %c0_i32_2 : i32, i32, i32, i32
  }
  func.func @transform_13(%arg0: i32) -> (i32, i32, i32, i32) {
    %c0_i32 = arith.constant 0 : i32
    %c0_i32_0 = arith.constant 0 : i32
    %c0_i32_1 = arith.constant 0 : i32
    %c0_i32_2 = arith.constant 0 : i32
    %c0_i32_3 = arith.constant 0 : i32
    return %c0_i32, %c0_i32_0, %c0_i32_1, %c0_i32_2 : i32, i32, i32, i32
  }
  func.func @transform_14(%arg0: i32) -> (i32, i32, i32, i32) {
    %c0_i32 = arith.constant 0 : i32
    %c0_i32_0 = arith.constant 0 : i32
    %c0_i32_1 = arith.constant 0 : i32
    %c0_i32_2 = arith.constant 0 : i32
    %c0_i32_3 = arith.constant 0 : i32
    return %c0_i32, %c0_i32_0, %c0_i32_1, %c0_i32_2 : i32, i32, i32, i32
  }
  func.func @transform_15(%arg0: i32) -> (i32, i32, i32) {
    %c0_i32 = arith.constant 0 : i32
    %c0_i32_0 = arith.constant 0 : i32
    %c0_i32_1 = arith.constant 0 : i32
    %c0_i32_2 = arith.constant 0 : i32
    return %c0_i32, %c0_i32_0, %c0_i32_1 : i32, i32, i32
  }
  func.func @transform_16(%arg0: i32) -> (i32, i32, i32) {
    %c0_i32 = arith.constant 0 : i32
    %c0_i32_0 = arith.constant 0 : i32
    %c0_i32_1 = arith.constant 0 : i32
    %c0_i32_2 = arith.constant 0 : i32
    return %c0_i32, %c0_i32_0, %c0_i32_1 : i32, i32, i32
  }
  func.func @transform_17(%arg0: i32) -> (i32, i32, i32) {
    %c0_i32 = arith.constant 0 : i32
    %c0_i32_0 = arith.constant 0 : i32
    %c0_i32_1 = arith.constant 0 : i32
    return %c0_i32, %c0_i32_0, %arg0 : i32, i32, i32
  }
}

</mosaic_0001>

<llo_original>
// kernel: tpu_custom_call.1
$region0: #{tpu_custom_call.1}
  #allocation0 [shape = 'u32[]', space=smem, size = 0x4, offset = 0x4, fixed_abs, tag = 'smem constant byte address 0x4 - core index']
  #allocation1 [shape = 'u32[72,128]{1,0:T(1,128)}', space=vmem, size = 0x9000, scoped, tag = 'internal scratch']
  %s0 = inlined_call_operand.vmem [shape: f32[4,256], index: 0, kind: input, shape index: {}]
  %s1 = inlined_call_operand.vmem [shape: f32[32,4], index: 1, kind: input, shape index: {}]
  %s2 = inlined_call_operand.vmem [shape: f32[32,1], index: 2, kind: input, shape index: {}]
  %s3 = inlined_call_operand.vmem [shape: f32[3,32,96], index: 3, kind: input, shape index: {}]
  %s4 = inlined_call_operand.vmem [shape: f32[3,32,1], index: 4, kind: input, shape index: {}]
  %s5 = inlined_call_operand.vmem [shape: f32[3,32,32], index: 5, kind: input, shape index: {}]
  %s6 = inlined_call_operand.vmem [shape: f32[3,32,1], index: 6, kind: input, shape index: {}]
  %s7 = inlined_call_operand.vmem [shape: f32[8,32], index: 7, kind: input, shape index: {}]
  %s8 = inlined_call_operand.vmem [shape: f32[8,1], index: 8, kind: input, shape index: {}]
  %s9 = inlined_call_operand.vmem [shape: f32[2,32,8], index: 9, kind: input, shape index: {}]
  %s10 = inlined_call_operand.vmem [shape: f32[2,32,1], index: 10, kind: input, shape index: {}]
  %s11 = inlined_call_operand.vmem [shape: f32[2,3,32,96], index: 11, kind: input, shape index: {}]
  %s12 = inlined_call_operand.vmem [shape: f32[2,3,32,1], index: 12, kind: input, shape index: {}]
  %s13 = inlined_call_operand.vmem [shape: f32[2,3,32,32], index: 13, kind: input, shape index: {}]
  %s14 = inlined_call_operand.vmem [shape: f32[2,3,32,1], index: 14, kind: input, shape index: {}]
  %s15 = inlined_call_operand.vmem [shape: f32[2,8,32], index: 15, kind: input, shape index: {}]
  %s16 = inlined_call_operand.vmem [shape: f32[2,8,1], index: 16, kind: input, shape index: {}]
  %s17 = inlined_call_operand.hbm [shape: f32[3,8,256], index: 17, kind: output, shape index: {}]
  %s18 = sld [smem:[#allocation0]]
  $region85: #{tpu_custom_call.1} parent=0
    _
  %s20 = ssub.s32 1, %s18
  %s21 = scalar_select 0, %s20, %s18
  $region1: #{tpu_custom_call.1} parent=0
    #allocation2 [shape = 'u8[24576]{0}', space=vmem, size = 0x6000, scoped, tag = 'output window, operand 0, single buffered']
    #allocation3 [shape = 's32[1]{0}', space=sflag, size = 0x4, scoped, tag = 'scoped memory for tpu_custom_call.1']
    %22 = vsyncpa [#allocation3], 0
    // Predicated region
    $region2: #{tpu_custom_call.1} parent=1 // pred_check
      _
    $region3: #{tpu_custom_call.1} parent=1 // pred_check_branch
      %24 = sbr.rel (0) target = $region5
    $region4: #{tpu_custom_call.1} parent=1 // pred_region
      _
    $region5: #{tpu_custom_call.1} parent=1 // pred_fallthru
      _
    // Predicated region
    $region6: #{tpu_custom_call.1} parent=1 // pred_check
      _
    $region7: #{tpu_custom_call.1} parent=1 // pred_check_branch
      %26 = sbr.rel (0) target = $region9
    $region8: #{tpu_custom_call.1} parent=1 // pred_region
      _
    $region9: #{tpu_custom_call.1} parent=1 // pred_fallthru
      _
    // Predicated region
    $region10: #{tpu_custom_call.1} parent=1 // pred_check
      _
    $region11: #{tpu_custom_call.1} parent=1 // pred_check_branch
      %28 = sbr.rel (0) target = $region13
    $region12: #{tpu_custom_call.1} parent=1 // pred_region
      _
    $region13: #{tpu_custom_call.1} parent=1 // pred_fallthru
      _
    // Predicated region
    $region14: #{tpu_custom_call.1} parent=1 // pred_check
      _
    $region15: #{tpu_custom_call.1} parent=1 // pred_check_branch
      %30 = sbr.rel (0) target = $region17
    $region16: #{tpu_custom_call.1} parent=1 // pred_region
      _
    $region17: #{tpu_custom_call.1} parent=1 // pred_fallthru
      _
    // Predicated region
    $region18: #{tpu_custom_call.1} parent=1 // pred_check
      _
    $region19: #{tpu_custom_call.1} parent=1 // pred_check_branch
      %32 = sbr.rel (0) target = $region21
    $region20: #{tpu_custom_call.1} parent=1 // pred_region
      _
    $region21: #{tpu_custom_call.1} parent=1 // pred_fallthru
      _
    // Predicated region
    $region22: #{tpu_custom_call.1} parent=1 // pred_check
      _
    $region23: #{tpu_custom_call.1} parent=1 // pred_check_branch
      %34 = sbr.rel (0) target = $region25
    $region24: #{tpu_custom_call.1} parent=1 // pred_region
      _
    $region25: #{tpu_custom_call.1} parent=1 // pred_fallthru
      _
    // Predicated region
    $region26: #{tpu_custom_call.1} parent=1 // pred_check
      _
    $region27: #{tpu_custom_call.1} parent=1 // pred_check_branch
      %36 = sbr.rel (0) target = $region29
    $region28: #{tpu_custom_call.1} parent=1 // pred_region
      _
    $region29: #{tpu_custom_call.1} parent=1 // pred_fallthru
      _
    // Predicated region
    $region30: #{tpu_custom_call.1} parent=1 // pred_check
      _
    $region31: #{tpu_custom_call.1} parent=1 // pred_check_branch
      %38 = sbr.rel (0) target = $region33
    $region32: #{tpu_custom_call.1} parent=1 // pred_region
      _
    $region33: #{tpu_custom_call.1} parent=1 // pred_fallthru
      _
    // Predicated region
    $region34: #{tpu_custom_call.1} parent=1 // pred_check
      _
    $region35: #{tpu_custom_call.1} parent=1 // pred_check_branch
      %40 = sbr.rel (0) target = $region37
    $region36: #{tpu_custom_call.1} parent=1 // pred_region
      _
    $region37: #{tpu_custom_call.1} parent=1 // pred_fallthru
      _
    // Predicated region
    $region38: #{tpu_custom_call.1} parent=1 // pred_check
      _
    $region39: #{tpu_custom_call.1} parent=1 // pred_check_branch
      %42 = sbr.rel (0) target = $region41
    $region40: #{tpu_custom_call.1} parent=1 // pred_region
      _
    $region41: #{tpu_custom_call.1} parent=1 // pred_fallthru
      _
    // Predicated region
    $region42: #{tpu_custom_call.1} parent=1 // pred_check
      _
    $region43: #{tpu_custom_call.1} parent=1 // pred_check_branch
      %44 = sbr.rel (0) target = $region45
    $region44: #{tpu_custom_call.1} parent=1 // pred_region
      _
    $region45: #{tpu_custom_call.1} parent=1 // pred_fallthru
      _
    // Predicated region
    $region46: #{tpu_custom_call.1} parent=1 // pred_check
      _
    $region47: #{tpu_custom_call.1} parent=1 // pred_check_branch
      %46 = sbr.rel (0) target = $region49
    $region48: #{tpu_custom_call.1} parent=1 // pred_region
      _
    $region49: #{tpu_custom_call.1} parent=1 // pred_fallthru
      _
    // Predicated region
    $region50: #{tpu_custom_call.1} parent=1 // pred_check
      _
    $region51: #{tpu_custom_call.1} parent=1 // pred_check_branch
      %48 = sbr.rel (0) target = $region53
    $region52: #{tpu_custom_call.1} parent=1 // pred_region
      _
    $region53: #{tpu_custom_call.1} parent=1 // pred_fallthru
      _
    // Predicated region
    $region54: #{tpu_custom_call.1} parent=1 // pred_check
      _
    $region55: #{tpu_custom_call.1} parent=1 // pred_check_branch
      %50 = sbr.rel (0) target = $region57
    $region56: #{tpu_custom_call.1} parent=1 // pred_region
      _
    $region57: #{tpu_custom_call.1} parent=1 // pred_fallthru
      _
    // Predicated region
    $region58: #{tpu_custom_call.1} parent=1 // pred_check
      _
    $region59: #{tpu_custom_call.1} parent=1 // pred_check_branch
      %52 = sbr.rel (0) target = $region61
    $region60: #{tpu_custom_call.1} parent=1 // pred_region
      _
    $region61: #{tpu_custom_call.1} parent=1 // pred_fallthru
      _
    // Predicated region
    $region62: #{tpu_custom_call.1} parent=1 // pred_check
      _
    $region63: #{tpu_custom_call.1} parent=1 // pred_check_branch
      %54 = sbr.rel (0) target = $region65
    $region64: #{tpu_custom_call.1} parent=1 // pred_region
      _
    $region65: #{tpu_custom_call.1} parent=1 // pred_fallthru
      _
    // Predicated region
    $region66: #{tpu_custom_call.1} parent=1 // pred_check
      _
    $region67: #{tpu_custom_call.1} parent=1 // pred_check_branch
      %56 = sbr.rel (0) target = $region69
    $region68: #{tpu_custom_call.1} parent=1 // pred_region
      _
    $region69: #{tpu_custom_call.1} parent=1 // pred_fallthru
      _
    %v57 = vlaneseq
    %v58 = vand.u32 %v57, 127
    %v59 = vadd.s32 %v58, 128
    %vm60 = vcmp.lt.s32.totalorder %v58, 0
    %v61 = vsub.s32 0, %v58
    %v62 = vsel %vm60, %v61, %v58
    %v63 = vshrl.u32 %v62, 7
    %v64 = vand.u32 %v62, 127
    %v65 = vsub.s32 0, %v64
    %v66 = vsel %vm60, %v65, %v64
    %vm67 = vcmp.lt.s32.totalorder %v59, 0
    %v68 = vsub.s32 0, %v59
    %v69 = vsel %vm67, %v68, %v59
    %v70 = vshrl.u32 %v69, 7
    %v71 = vand.u32 %v69, 127
    %v72 = vsub.s32 0, %v71
    %v73 = vsel %vm67, %v72, %v71
    %vm74 = vcmp.ne.s32.totalorder %v66, 0
    %vm75 = vcmp.ne.s32.totalorder %v73, 0
    %vm76 = vcmp.lt.s32.totalorder %v66, 0
    %vm77 = vcmp.lt.s32.totalorder %v73, 0
    %vm78 = vmand %vm76, %vm74
    %vm79 = vmand %vm77, %vm75
    %v80 = vadd.s32 %v66, 128
    %v81 = vadd.s32 %v73, 128
    %v82 = vsel %vm78, %v80, %v66
    %v83 = vsel %vm79, %v81, %v73
    %v84 = vadd.s32 %v82, 4294967295
    %v85 = vadd.s32 %v83, 4294967295
    %vm86 = vcmp.ge.s32.totalorder %v84, 0
    %vm87 = vcmp.ge.s32.totalorder %v85, 0
    %vm88 = vcmp.lt.s32.totalorder %v84, 128
    %vm89 = vcmp.lt.s32.totalorder %v85, 128
    %vm90 = vmand %vm86, %vm88
    %vm91 = vmand %vm87, %vm89
    %v92 = vadd.s32 %v82, 1
    %v93 = vadd.s32 %v83, 1
    %vm94 = vcmp.ge.s32.totalorder %v92, 0
    %vm95 = vcmp.ge.s32.totalorder %v93, 0
    %vm96 = vcmp.lt.s32.totalorder %v92, 128
    %vm97 = vcmp.lt.s32.totalorder %v93, 128
    %vm98 = vmand %vm94, %vm96
    %vm99 = vmand %vm95, %vm97
    %v100 = vadd.s32 %v82, 4294967294
    %v101 = vadd.s32 %v83, 4294967294
    %vm102 = vcmp.ge.s32.totalorder %v100, 0
    %vm103 = vcmp.ge.s32.totalorder %v101, 0
    %vm104 = vcmp.lt.s32.totalorder %v100, 128
    %vm105 = vcmp.lt.s32.totalorder %v101, 128
    %vm106 = vmand %vm102, %vm104
    %vm107 = vmand %vm103, %vm105
    %v108 = vadd.s32 %v82, 2
    %v109 = vadd.s32 %v83, 2
    %vm110 = vcmp.ge.s32.totalorder %v108, 0
    %vm111 = vcmp.ge.s32.totalorder %v109, 0
    %vm112 = vcmp.lt.s32.totalorder %v108, 128
    %vm113 = vcmp.lt.s32.totalorder %v109, 128
    %vm114 = vmand %vm110, %vm112
    %vm115 = vmand %vm111, %vm113
    %v116 = vadd.s32 %v82, 4294967292
    %v117 = vadd.s32 %v83, 4294967292
    %vm118 = vcmp.ge.s32.totalorder %v116, 0
    %vm119 = vcmp.ge.s32.totalorder %v117, 0
    %vm120 = vcmp.lt.s32.totalorder %v116, 128
    %vm121 = vcmp.lt.s32.totalorder %v117, 128
    %vm122 = vmand %vm118, %vm120
    %vm123 = vmand %vm119, %vm121
    %v124 = vadd.s32 %v82, 4
    %v125 = vadd.s32 %v83, 4
    %vm126 = vcmp.ge.s32.totalorder %v124, 0
    %vm127 = vcmp.ge.s32.totalorder %v125, 0
    %vm128 = vcmp.lt.s32.totalorder %v124, 128
    %vm129 = vcmp.lt.s32.totalorder %v125, 128
    %vm130 = vmand %vm126, %vm128
    %vm131 = vmand %vm127, %vm129
    %v132 = vld [vmem:[%s0] sm:$0xff]
    %v133 = vld [vmem:[%s1] sm:$0xff]
    %v134 = vld [vmem:[%s1 + $0x8] sm:$0xff]
    %v135 = vld [vmem:[%s1 + $0x10] sm:$0xff]
    %v136 = vld [vmem:[%s1 + $0x18] sm:$0xff]
    %v137 = vld [vmem:[%s2] sm:$0xff]
    %v138 = vld [vmem:[%s2 + $0x8] sm:$0xff]
    %v139 = vld [vmem:[%s2 + $0x10] sm:$0xff]
    %v140 = vld [vmem:[%s2 + $0x18] sm:$0xff]
    %v141 = vld [vmem:[%s3] sm:$0xff]
    %v142 = vld [vmem:[%s3 + $0x8] sm:$0xff]
    %v143 = vld [vmem:[%s3 + $0x10] sm:$0xff]
    %v144 = vld [vmem:[%s3 + $0x18] sm:$0xff]
    %v145 = vld [vmem:[%s3 + $0x20] sm:$0xff]
    %v146 = vld [vmem:[%s3 + $0x28] sm:$0xff]
    %v147 = vld [vmem:[%s3 + $0x30] sm:$0xff]
    %v148 = vld [vmem:[%s3 + $0x38] sm:$0xff]
    %v149 = vld [vmem:[%s3 + $0x40] sm:$0xff]
    %v150 = vld [vmem:[%s3 + $0x48] sm:$0xff]
    %v151 = vld [vmem:[%s3 + $0x50] sm:$0xff]
    %v152 = vld [vmem:[%s3 + $0x58] sm:$0xff]
    %v153 = vld [vmem:[%s4] sm:$0xff]
    %v154 = vld [vmem:[%s4 + $0x8] sm:$0xff]
    %v155 = vld [vmem:[%s4 + $0x10] sm:$0xff]
    %v156 = vld [vmem:[%s4 + $0x18] sm:$0xff]
    %v157 = vld [vmem:[%s4 + $0x20] sm:$0xff]
    %v158 = vld [vmem:[%s4 + $0x28] sm:$0xff]
    %v159 = vld [vmem:[%s4 + $0x30] sm:$0xff]
    %v160 = vld [vmem:[%s4 + $0x38] sm:$0xff]
    %v161 = vld [vmem:[%s4 + $0x40] sm:$0xff]
    %v162 = vld [vmem:[%s4 + $0x48] sm:$0xff]
    %v163 = vld [vmem:[%s4 + $0x50] sm:$0xff]
    %v164 = vld [vmem:[%s4 + $0x58] sm:$0xff]
    %v165 = vld [vmem:[%s5] sm:$0xff]
    %v166 = vld [vmem:[%s5 + $0x8] sm:$0xff]
    %v167 = vld [vmem:[%s5 + $0x10] sm:$0xff]
    %v168 = vld [vmem:[%s5 + $0x18] sm:$0xff]
    %v169 = vld [vmem:[%s5 + $0x20] sm:$0xff]
    %v170 = vld [vmem:[%s5 + $0x28] sm:$0xff]
    %v171 = vld [vmem:[%s5 + $0x30] sm:$0xff]
    %v172 = vld [vmem:[%s5 + $0x38] sm:$0xff]
    %v173 = vld [vmem:[%s5 + $0x40] sm:$0xff]
    %v174 = vld [vmem:[%s5 + $0x48] sm:$0xff]
    %v175 = vld [vmem:[%s5 + $0x50] sm:$0xff]
    %v176 = vld [vmem:[%s5 + $0x58] sm:$0xff]
    %v177 = vld [vmem:[%s6] sm:$0xff]
    %v178 = vld [vmem:[%s6 + $0x8] sm:$0xff]
    %v179 = vld [vmem:[%s6 + $0x10] sm:$0xff]
    %v180 = vld [vmem:[%s6 + $0x18] sm:$0xff]
    %v181 = vld [vmem:[%s6 + $0x20] sm:$0xff]
    %v182 = vld [vmem:[%s6 + $0x28] sm:$0xff]
    %v183 = vld [vmem:[%s6 + $0x30] sm:$0xff]
    %v184 = vld [vmem:[%s6 + $0x38] sm:$0xff]
    %v185 = vld [vmem:[%s6 + $0x40] sm:$0xff]
    %v186 = vld [vmem:[%s6 + $0x48] sm:$0xff]
    %v187 = vld [vmem:[%s6 + $0x50] sm:$0xff]
    %v188 = vld [vmem:[%s6 + $0x58] sm:$0xff]
    %v189 = vld [vmem:[%s7] sm:$0xff]
    %v190 = vld [vmem:[%s8] sm:$0xff]
    %192 = vset.pattern.permute.xlu0 0
    %193 = vperm.xlu0 %192, %v137
    %v194 = vpop.permute.xlu0 %193
    %197 = vset.pattern.permute.xlu0 0
    %198 = vperm.xlu0 %197, %v138
    %v199 = vpop.permute.xlu0 %198
    %202 = vset.pattern.permute.xlu0 0
    %203 = vperm.xlu0 %202, %v139
    %v204 = vpop.permute.xlu0 %203
    %207 = vset.pattern.permute.xlu0 0
    %208 = vperm.xlu0 %207, %v140
    %v209 = vpop.permute.xlu0 %208
    %212 = vst [vmem:[#allocation1] ss:$2 sm:$0xff] %v132
    %v213 = vld.sshfl [vmem:[#allocation1] sm:$0xff pattern:$0x75316420]
    %v214 = vld.sshfl [vmem:[#allocation1 + $0x8] sm:$0xff pattern:$0x75316420]
    %vm215 = vcmask 31744
    %v217 = vsel %vm215, %v133, 0
    %v220 = vsel %vm215, %v134, 0
    %v223 = vsel %vm215, %v135, 0
    %v226 = vsel %vm215, %v136, 0
    %vm228 = vcmask 1043456
    %v229 = vsel %vm228, %v213, 0
    %v231 = vsel %vm228, %v214, 0
    %233 = vmatpush.msra.mxu0 0.0
    %234 = vmatpush.msra.mxu0 0.0
    %235 = vmatpush.msra.mxu0 0.0
    %236 = vmatpush.msra.mxu0 0.0
    %237 = vmatpush.msra.mxu0 0.0
    %238 = vmatpush.msra.mxu0 0.0
    %239 = vmatpush.msra.mxu0 0.0
    %240 = vmatpush.msra.mxu0 0.0
    %241 = vmatpush.msra.mxu0 0.0
    %242 = vmatpush.msra.mxu0 0.0
    %243 = vmatpush.msra.mxu0 0.0
    %244 = vmatpush.msra.mxu0 0.0
    %245 = vmatpush.msra.mxu0 0.0
    %246 = vmatpush.msra.mxu0 0.0
    %247 = vmatpush.msra.mxu0 0.0
    %248 = vmatpush.msra.mxu0 %v229
    %249 = vmatmul.f32.gmra.mxu0 %v217
    %v250 = vpop.f32.mrf.mxu0
    %v251 = vadd.f32 %v194, %v250
    %252 = vmatmul.f32.gmra.mxu0 %v220
    %v253 = vpop.f32.mrf.mxu0
    %v254 = vadd.f32 %v199, %v253
    %255 = vmatmul.f32.gmra.mxu0 %v223
    %v256 = vpop.f32.mrf.mxu0
    %v257 = vadd.f32 %v204, %v256
    %258 = vmatmul.f32.gmra.mxu0 %v226
    %v259 = vpop.f32.mrf.mxu0
    %v260 = vadd.f32 %v209, %v259
    %261 = vdwg.mxu0
    %262 = vmatpush.msra.mxu0 0.0
    %263 = vmatpush.msra.mxu0 0.0
    %264 = vmatpush.msra.mxu0 0.0
    %265 = vmatpush.msra.mxu0 0.0
    %266 = vmatpush.msra.mxu0 0.0
    %267 = vmatpush.msra.mxu0 0.0
    %268 = vmatpush.msra.mxu0 0.0
    %269 = vmatpush.msra.mxu0 0.0
    %270 = vmatpush.msra.mxu0 0.0
    %271 = vmatpush.msra.mxu0 0.0
    %272 = vmatpush.msra.mxu0 0.0
    %273 = vmatpush.msra.mxu0 0.0
    %274 = vmatpush.msra.mxu0 0.0
    %275 = vmatpush.msra.mxu0 0.0
    %276 = vmatpush.msra.mxu0 0.0
    %277 = vmatpush.msra.mxu0 %v231
    %278 = vmatmul.f32.gmra.mxu0 %v217
    %v279 = vpop.f32.mrf.mxu0
    %v280 = vadd.f32 %v194, %v279
    %281 = vmatmul.f32.gmra.mxu0 %v220
    %v282 = vpop.f32.mrf.mxu0
    %v283 = vadd.f32 %v199, %v282
    %284 = vmatmul.f32.gmra.mxu0 %v223
    %v285 = vpop.f32.mrf.mxu0
    %v286 = vadd.f32 %v204, %v285
    %287 = vmatmul.f32.gmra.mxu0 %v226
    %v288 = vpop.f32.mrf.mxu0
    %v289 = vadd.f32 %v209, %v288
    %290 = vdwg.mxu0
    %291 = vrot.lane.b32.xlu0 %v251, 1
    %v292 = vpop.permute.xlu0 %291
    %293 = vrot.lane.b32.xlu0 %v254, 1
    %v294 = vpop.permute.xlu0 %293
    %295 = vrot.lane.b32.xlu0 %v257, 1
    %v296 = vpop.permute.xlu0 %295
    %297 = vrot.lane.b32.xlu0 %v260, 1
    %v298 = vpop.permute.xlu0 %297
    %299 = vrot.lane.b32.xlu0 %v280, 1
    %v300 = vpop.permute.xlu0 %299
    %301 = vrot.lane.b32.xlu0 %v283, 1
    %v302 = vpop.permute.xlu0 %301
    %303 = vrot.lane.b32.xlu0 %v286, 1
    %v304 = vpop.permute.xlu0 %303
    %305 = vrot.lane.b32.xlu0 %v289, 1
    %v306 = vpop.permute.xlu0 %305
    %vm307 = vcmp.lt.s32.totalorder %v58, 1
    %v308 = vsel %vm307, %v292, %v300
    %v309 = vsel %vm307, %v294, %v302
    %v310 = vsel %vm307, %v296, %v304
    %v311 = vsel %vm307, %v298, %v306
    %v312 = vsel %vm307, %v300, %v292
    %v313 = vsel %vm307, %v302, %v294
    %v314 = vsel %vm307, %v304, %v296
    %v315 = vsel %vm307, %v306, %v298
    %v316 = vsel %vm90, %v312, 0.0
    %v317 = vsel %vm91, %v308, 0.0
    %v318 = vsel %vm90, %v313, 0.0
    %v319 = vsel %vm91, %v309, 0.0
    %v320 = vsel %vm90, %v314, 0.0
    %v321 = vsel %vm91, %v310, 0.0
    %v322 = vsel %vm90, %v315, 0.0
    %v323 = vsel %vm91, %v311, 0.0
    %324 = vrot.lane.b32.xlu0 %v251, 127
    %v325 = vpop.permute.xlu0 %324
    %326 = vrot.lane.b32.xlu0 %v254, 127
    %v327 = vpop.permute.xlu0 %326
    %328 = vrot.lane.b32.xlu0 %v257, 127
    %v329 = vpop.permute.xlu0 %328
    %330 = vrot.lane.b32.xlu0 %v260, 127
    %v331 = vpop.permute.xlu0 %330
    %332 = vrot.lane.b32.xlu0 %v280, 127
    %v333 = vpop.permute.xlu0 %332
    %334 = vrot.lane.b32.xlu0 %v283, 127
    %v335 = vpop.permute.xlu0 %334
    %336 = vrot.lane.b32.xlu0 %v286, 127
    %v337 = vpop.permute.xlu0 %336
    %338 = vrot.lane.b32.xlu0 %v289, 127
    %v339 = vpop.permute.xlu0 %338
    %vm340 = vcmp.lt.s32.totalorder %v58, 127
    %v341 = vsel %vm340, %v325, %v333
    %v342 = vsel %vm340, %v327, %v335
    %v343 = vsel %vm340, %v329, %v337
    %v344 = vsel %vm340, %v331, %v339
    %v345 = vsel %vm340, %v333, %v325
    %v346 = vsel %vm340, %v335, %v327
    %v347 = vsel %vm340, %v337, %v329
    %v348 = vsel %vm340, %v339, %v331
    %v349 = vsel %vm98, %v341, 0.0
    %v350 = vsel %vm99, %v345, 0.0
    %v351 = vsel %vm98, %v342, 0.0
    %v352 = vsel %vm99, %v346, 0.0
    %v353 = vsel %vm98, %v343, 0.0
    %v354 = vsel %vm99, %v347, 0.0
    %v355 = vsel %vm98, %v344, 0.0
    %v356 = vsel %vm99, %v348, 0.0
    %358 = vset.pattern.permute.xlu0 0
    %359 = vperm.xlu0 %358, %v153
    %v360 = vpop.permute.xlu0 %359
    %363 = vset.pattern.permute.xlu0 0
    %364 = vperm.xlu0 %363, %v154
    %v365 = vpop.permute.xlu0 %364
    %368 = vset.pattern.permute.xlu0 0
    %369 = vperm.xlu0 %368, %v155
    %v370 = vpop.permute.xlu0 %369
    %373 = vset.pattern.permute.xlu0 0
    %374 = vperm.xlu0 %373, %v156
    %v375 = vpop.permute.xlu0 %374
    %vm377 = vcmask 785408
    %v379 = vsel %vm377, %v141, 0
    %v382 = vsel %vm377, %v142, 0
    %v385 = vsel %vm377, %v143, 0
    %v388 = vsel %vm377, %v144, 0
    %390 = vmatpush.msra.mxu0 0.0
    %391 = vmatpush.msra.mxu0 0.0
    %392 = vmatpush.msra.mxu0 0.0
    %393 = vmatpush.msra.mxu0 0.0
    %394 = vmatpush.msra.mxu0 %v355
    %395 = vmatpush.msra.mxu0 %v353
    %396 = vmatpush.msra.mxu0 %v351
    %397 = vmatpush.msra.mxu0 %v349
    %398 = vmatpush.msra.mxu0 %v260
    %399 = vmatpush.msra.mxu0 %v257
    %400 = vmatpush.msra.mxu0 %v254
    %401 = vmatpush.msra.mxu0 %v251
    %402 = vmatpush.msra.mxu0 %v322
    %403 = vmatpush.msra.mxu0 %v320
    %404 = vmatpush.msra.mxu0 %v318
    %405 = vmatpush.msra.mxu0 %v316
    %406 = vmatmul.f32.gmra.mxu0 %v379
    %v407 = vpop.f32.mrf.mxu0
    %v408 = vadd.f32 %v360, %v407
    %409 = vmatmul.f32.gmra.mxu0 %v382
    %v410 = vpop.f32.mrf.mxu0
    %v411 = vadd.f32 %v365, %v410
    %412 = vmatmul.f32.gmra.mxu0 %v385
    %v413 = vpop.f32.mrf.mxu0
    %v414 = vadd.f32 %v370, %v413
    %415 = vmatmul.f32.gmra.mxu0 %v388
    %v416 = vpop.f32.mrf.mxu0
    %v417 = vadd.f32 %v375, %v416
    %418 = vdwg.mxu0
    %419 = vmatpush.msra.mxu0 0.0
    %420 = vmatpush.msra.mxu0 0.0
    %421 = vmatpush.msra.mxu0 0.0
    %422 = vmatpush.msra.mxu0 0.0
    %423 = vmatpush.msra.mxu0 %v356
    %424 = vmatpush.msra.mxu0 %v354
    %425 = vmatpush.msra.mxu0 %v352
    %426 = vmatpush.msra.mxu0 %v350
    %427 = vmatpush.msra.mxu0 %v289
    %428 = vmatpush.msra.mxu0 %v286
    %429 = vmatpush.msra.mxu0 %v283
    %430 = vmatpush.msra.mxu0 %v280
    %431 = vmatpush.msra.mxu0 %v323
    %432 = vmatpush.msra.mxu0 %v321
    %433 = vmatpush.msra.mxu0 %v319
    %434 = vmatpush.msra.mxu0 %v317
    %435 = vmatmul.f32.gmra.mxu0 %v379
    %v436 = vpop.f32.mrf.mxu0
    %v437 = vadd.f32 %v360, %v436
    %438 = vmatmul.f32.gmra.mxu0 %v382
    %v439 = vpop.f32.mrf.mxu0
    %v440 = vadd.f32 %v365, %v439
    %441 = vmatmul.f32.gmra.mxu0 %v385
    %v442 = vpop.f32.mrf.mxu0
    %v443 = vadd.f32 %v370, %v442
    %444 = vmatmul.f32.gmra.mxu0 %v388
    %v445 = vpop.f32.mrf.mxu0
    %v446 = vadd.f32 %v375, %v445
    %447 = vdwg.mxu0
    %v448 = vmax.f32 %v408, 0.0
    %v449 = vmax.f32 %v437, 0.0
    %v450 = vmax.f32 %v411, 0.0
    %v451 = vmax.f32 %v440, 0.0
    %v452 = vmax.f32 %v414, 0.0
    %v453 = vmax.f32 %v443, 0.0
    %v454 = vmax.f32 %v417, 0.0
    %v455 = vmax.f32 %v446, 0.0
    %457 = vset.pattern.permute.xlu0 0
    %458 = vperm.xlu0 %457, %v177
    %v459 = vpop.permute.xlu0 %458
    %462 = vset.pattern.permute.xlu0 0
    %463 = vperm.xlu0 %462, %v178
    %v464 = vpop.permute.xlu0 %463
    %467 = vset.pattern.permute.xlu0 0
    %468 = vperm.xlu0 %467, %v179
    %v469 = vpop.permute.xlu0 %468
    %472 = vset.pattern.permute.xlu0 0
    %473 = vperm.xlu0 %472, %v180
    %v474 = vpop.permute.xlu0 %473
    %vm476 = vcmask 261120
    %v478 = vsel %vm476, %v165, 0
    %v481 = vsel %vm476, %v166, 0
    %v484 = vsel %vm476, %v167, 0
    %v487 = vsel %vm476, %v168, 0
    %489 = vmatpush.msra.mxu0 0.0
    %490 = vmatpush.msra.mxu0 0.0
    %491 = vmatpush.msra.mxu0 0.0
    %492 = vmatpush.msra.mxu0 0.0
    %493 = vmatpush.msra.mxu0 0.0
    %494 = vmatpush.msra.mxu0 0.0
    %495 = vmatpush.msra.mxu0 0.0
    %496 = vmatpush.msra.mxu0 0.0
    %497 = vmatpush.msra.mxu0 0.0
    %498 = vmatpush.msra.mxu0 0.0
    %499 = vmatpush.msra.mxu0 0.0
    %500 = vmatpush.msra.mxu0 0.0
    %501 = vmatpush.msra.mxu0 %v454
    %502 = vmatpush.msra.mxu0 %v452
    %503 = vmatpush.msra.mxu0 %v450
    %504 = vmatpush.msra.mxu0 %v448
    %505 = vmatmul.f32.gmra.mxu0 %v478
    %v506 = vpop.f32.mrf.mxu0
    %v507 = vadd.f32 %v459, %v506
    %508 = vmatmul.f32.gmra.mxu0 %v481
    %v509 = vpop.f32.mrf.mxu0
    %v510 = vadd.f32 %v464, %v509
    %511 = vmatmul.f32.gmra.mxu0 %v484
    %v512 = vpop.f32.mrf.mxu0
    %v513 = vadd.f32 %v469, %v512
    %514 = vmatmul.f32.gmra.mxu0 %v487
    %v515 = vpop.f32.mrf.mxu0
    %v516 = vadd.f32 %v474, %v515
    %517 = vdwg.mxu0
    %518 = vmatpush.msra.mxu0 0.0
    %519 = vmatpush.msra.mxu0 0.0
    %520 = vmatpush.msra.mxu0 0.0
    %521 = vmatpush.msra.mxu0 0.0
    %522 = vmatpush.msra.mxu0 0.0
    %523 = vmatpush.msra.mxu0 0.0
    %524 = vmatpush.msra.mxu0 0.0
    %525 = vmatpush.msra.mxu0 0.0
    %526 = vmatpush.msra.mxu0 0.0
    %527 = vmatpush.msra.mxu0 0.0
    %528 = vmatpush.msra.mxu0 0.0
    %529 = vmatpush.msra.mxu0 0.0
    %530 = vmatpush.msra.mxu0 %v455
    %531 = vmatpush.msra.mxu0 %v453
    %532 = vmatpush.msra.mxu0 %v451
    %533 = vmatpush.msra.mxu0 %v449
    %534 = vmatmul.f32.gmra.mxu0 %v478
    %v535 = vpop.f32.mrf.mxu0
    %v536 = vadd.f32 %v459, %v535
    %537 = vmatmul.f32.gmra.mxu0 %v481
    %v538 = vpop.f32.mrf.mxu0
    %v539 = vadd.f32 %v464, %v538
    %540 = vmatmul.f32.gmra.mxu0 %v484
    %v541 = vpop.f32.mrf.mxu0
    %v542 = vadd.f32 %v469, %v541
    %543 = vmatmul.f32.gmra.mxu0 %v487
    %v544 = vpop.f32.mrf.mxu0
    %v545 = vadd.f32 %v474, %v544
    %546 = vdwg.mxu0
    %v547 = vadd.f32 %v251, %v507
    %v548 = vadd.f32 %v280, %v536
    %v549 = vadd.f32 %v254, %v510
    %v550 = vadd.f32 %v283, %v539
    %v551 = vadd.f32 %v257, %v513
    %v552 = vadd.f32 %v286, %v542
    %v553 = vadd.f32 %v260, %v516
    %v554 = vadd.f32 %v289, %v545
    %555 = vrot.lane.b32.xlu0 %v547, 2
    %v556 = vpop.permute.xlu0 %555
    %557 = vrot.lane.b32.xlu0 %v549, 2
    %v558 = vpop.permute.xlu0 %557
    %559 = vrot.lane.b32.xlu0 %v551, 2
    %v560 = vpop.permute.xlu0 %559
    %561 = vrot.lane.b32.xlu0 %v553, 2
    %v562 = vpop.permute.xlu0 %561
    %563 = vrot.lane.b32.xlu0 %v548, 2
    %v564 = vpop.permute.xlu0 %563
    %565 = vrot.lane.b32.xlu0 %v550, 2
    %v566 = vpop.permute.xlu0 %565
    %567 = vrot.lane.b32.xlu0 %v552, 2
    %v568 = vpop.permute.xlu0 %567
    %569 = vrot.lane.b32.xlu0 %v554, 2
    %v570 = vpop.permute.xlu0 %569
    %vm571 = vcmp.lt.s32.totalorder %v58, 2
    %v572 = vsel %vm571, %v556, %v564
    %v573 = vsel %vm571, %v558, %v566
    %v574 = vsel %vm571, %v560, %v568
    %v575 = vsel %vm571, %v562, %v570
    %v576 = vsel %vm571, %v564, %v556
    %v577 = vsel %vm571, %v566, %v558
    %v578 = vsel %vm571, %v568, %v560
    %v579 = vsel %vm571, %v570, %v562
    %v580 = vsel %vm106, %v576, 0.0
    %v581 = vsel %vm107, %v572, 0.0
    %v582 = vsel %vm106, %v577, 0.0
    %v583 = vsel %vm107, %v573, 0.0
    %v584 = vsel %vm106, %v578, 0.0
    %v585 = vsel %vm107, %v574, 0.0
    %v586 = vsel %vm106, %v579, 0.0
    %v587 = vsel %vm107, %v575, 0.0
    %588 = vrot.lane.b32.xlu0 %v547, 126
    %v589 = vpop.permute.xlu0 %588
    %590 = vrot.lane.b32.xlu0 %v549, 126
    %v591 = vpop.permute.xlu0 %590
    %592 = vrot.lane.b32.xlu0 %v551, 126
    %v593 = vpop.permute.xlu0 %592
    %594 = vrot.lane.b32.xlu0 %v553, 126
    %v595 = vpop.permute.xlu0 %594
    %596 = vrot.lane.b32.xlu0 %v548, 126
    %v597 = vpop.permute.xlu0 %596
    %598 = vrot.lane.b32.xlu0 %v550, 126
    %v599 = vpop.permute.xlu0 %598
    %600 = vrot.lane.b32.xlu0 %v552, 126
    %v601 = vpop.permute.xlu0 %600
    %602 = vrot.lane.b32.xlu0 %v554, 126
    %v603 = vpop.permute.xlu0 %602
    %vm604 = vcmp.lt.s32.totalorder %v58, 126
    %v605 = vsel %vm604, %v589, %v597
    %v606 = vsel %vm604, %v591, %v599
    %v607 = vsel %vm604, %v593, %v601
    %v608 = vsel %vm604, %v595, %v603
    %v609 = vsel %vm604, %v597, %v589
    %v610 = vsel %vm604, %v599, %v591
    %v611 = vsel %vm604, %v601, %v593
    %v612 = vsel %vm604, %v603, %v595
    %v613 = vsel %vm114, %v605, 0.0
    %v614 = vsel %vm115, %v609, 0.0
    %v615 = vsel %vm114, %v606, 0.0
    %v616 = vsel %vm115, %v610, 0.0
    %v617 = vsel %vm114, %v607, 0.0
    %v618 = vsel %vm115, %v611, 0.0
    %v619 = vsel %vm114, %v608, 0.0
    %v620 = vsel %vm115, %v612, 0.0
    %622 = vset.pattern.permute.xlu0 0
    %623 = vperm.xlu0 %622, %v157
    %v624 = vpop.permute.xlu0 %623
    %627 = vset.pattern.permute.xlu0 0
    %628 = vperm.xlu0 %627, %v158
    %v629 = vpop.permute.xlu0 %628
    %632 = vset.pattern.permute.xlu0 0
    %633 = vperm.xlu0 %632, %v159
    %v634 = vpop.permute.xlu0 %633
    %637 = vset.pattern.permute.xlu0 0
    %638 = vperm.xlu0 %637, %v160
    %v639 = vpop.permute.xlu0 %638
    %v642 = vsel %vm377, %v145, 0
    %v645 = vsel %vm377, %v146, 0
    %v648 = vsel %vm377, %v147, 0
    %v651 = vsel %vm377, %v148, 0
    %653 = vmatpush.msra.mxu0 0.0
    %654 = vmatpush.msra.mxu0 0.0
    %655 = vmatpush.msra.mxu0 0.0
    %656 = vmatpush.msra.mxu0 0.0
    %657 = vmatpush.msra.mxu0 %v619
    %658 = vmatpush.msra.mxu0 %v617
    %659 = vmatpush.msra.mxu0 %v615
    %660 = vmatpush.msra.mxu0 %v613
    %661 = vmatpush.msra.mxu0 %v553
    %662 = vmatpush.msra.mxu0 %v551
    %663 = vmatpush.msra.mxu0 %v549
    %664 = vmatpush.msra.mxu0 %v547
    %665 = vmatpush.msra.mxu0 %v586
    %666 = vmatpush.msra.mxu0 %v584
    %667 = vmatpush.msra.mxu0 %v582
    %668 = vmatpush.msra.mxu0 %v580
    %669 = vmatmul.f32.gmra.mxu0 %v642
    %v670 = vpop.f32.mrf.mxu0
    %v671 = vadd.f32 %v624, %v670
    %672 = vmatmul.f32.gmra.mxu0 %v645
    %v673 = vpop.f32.mrf.mxu0
    %v674 = vadd.f32 %v629, %v673
    %675 = vmatmul.f32.gmra.mxu0 %v648
    %v676 = vpop.f32.mrf.mxu0
    %v677 = vadd.f32 %v634, %v676
    %678 = vmatmul.f32.gmra.mxu0 %v651
    %v679 = vpop.f32.mrf.mxu0
    %v680 = vadd.f32 %v639, %v679
    %681 = vdwg.mxu0
    %682 = vmatpush.msra.mxu0 0.0
    %683 = vmatpush.msra.mxu0 0.0
    %684 = vmatpush.msra.mxu0 0.0
    %685 = vmatpush.msra.mxu0 0.0
    %686 = vmatpush.msra.mxu0 %v620
    %687 = vmatpush.msra.mxu0 %v618
    %688 = vmatpush.msra.mxu0 %v616
    %689 = vmatpush.msra.mxu0 %v614
    %690 = vmatpush.msra.mxu0 %v554
    %691 = vmatpush.msra.mxu0 %v552
    %692 = vmatpush.msra.mxu0 %v550
    %693 = vmatpush.msra.mxu0 %v548
    %694 = vmatpush.msra.mxu0 %v587
    %695 = vmatpush.msra.mxu0 %v585
    %696 = vmatpush.msra.mxu0 %v583
    %697 = vmatpush.msra.mxu0 %v581
    %698 = vmatmul.f32.gmra.mxu0 %v642
    %v699 = vpop.f32.mrf.mxu0
    %v700 = vadd.f32 %v624, %v699
    %701 = vmatmul.f32.gmra.mxu0 %v645
    %v702 = vpop.f32.mrf.mxu0
    %v703 = vadd.f32 %v629, %v702
    %704 = vmatmul.f32.gmra.mxu0 %v648
    %v705 = vpop.f32.mrf.mxu0
    %v706 = vadd.f32 %v634, %v705
    %707 = vmatmul.f32.gmra.mxu0 %v651
    %v708 = vpop.f32.mrf.mxu0
    %v709 = vadd.f32 %v639, %v708
    %710 = vdwg.mxu0
    %v711 = vmax.f32 %v671, 0.0
    %v712 = vmax.f32 %v700, 0.0
    %v713 = vmax.f32 %v674, 0.0
    %v714 = vmax.f32 %v703, 0.0
    %v715 = vmax.f32 %v677, 0.0
    %v716 = vmax.f32 %v706, 0.0
    %v717 = vmax.f32 %v680, 0.0
    %v718 = vmax.f32 %v709, 0.0
    %720 = vset.pattern.permute.xlu0 0
    %721 = vperm.xlu0 %720, %v181
    %v722 = vpop.permute.xlu0 %721
    %725 = vset.pattern.permute.xlu0 0
    %726 = vperm.xlu0 %725, %v182
    %v727 = vpop.permute.xlu0 %726
    %730 = vset.pattern.permute.xlu0 0
    %731 = vperm.xlu0 %730, %v183
    %v732 = vpop.permute.xlu0 %731
    %735 = vset.pattern.permute.xlu0 0
    %736 = vperm.xlu0 %735, %v184
    %v737 = vpop.permute.xlu0 %736
    %v740 = vsel %vm476, %v169, 0
    %v743 = vsel %vm476, %v170, 0
    %v746 = vsel %vm476, %v171, 0
    %v749 = vsel %vm476, %v172, 0
    %751 = vmatpush.msra.mxu0 0.0
    %752 = vmatpush.msra.mxu0 0.0
    %753 = vmatpush.msra.mxu0 0.0
    %754 = vmatpush.msra.mxu0 0.0
    %755 = vmatpush.msra.mxu0 0.0
    %756 = vmatpush.msra.mxu0 0.0
    %757 = vmatpush.msra.mxu0 0.0
    %758 = vmatpush.msra.mxu0 0.0
    %759 = vmatpush.msra.mxu0 0.0
    %760 = vmatpush.msra.mxu0 0.0
    %761 = vmatpush.msra.mxu0 0.0
    %762 = vmatpush.msra.mxu0 0.0
    %763 = vmatpush.msra.mxu0 %v717
    %764 = vmatpush.msra.mxu0 %v715
    %765 = vmatpush.msra.mxu0 %v713
    %766 = vmatpush.msra.mxu0 %v711
    %767 = vmatmul.f32.gmra.mxu0 %v740
    %v768 = vpop.f32.mrf.mxu0
    %v769 = vadd.f32 %v722, %v768
    %770 = vmatmul.f32.gmra.mxu0 %v743
    %v771 = vpop.f32.mrf.mxu0
    %v772 = vadd.f32 %v727, %v771
    %773 = vmatmul.f32.gmra.mxu0 %v746
    %v774 = vpop.f32.mrf.mxu0
    %v775 = vadd.f32 %v732, %v774
    %776 = vmatmul.f32.gmra.mxu0 %v749
    %v777 = vpop.f32.mrf.mxu0
    %v778 = vadd.f32 %v737, %v777
    %779 = vdwg.mxu0
    %780 = vmatpush.msra.mxu0 0.0
    %781 = vmatpush.msra.mxu0 0.0
    %782 = vmatpush.msra.mxu0 0.0
    %783 = vmatpush.msra.mxu0 0.0
    %784 = vmatpush.msra.mxu0 0.0
    %785 = vmatpush.msra.mxu0 0.0
    %786 = vmatpush.msra.mxu0 0.0
    %787 = vmatpush.msra.mxu0 0.0
    %788 = vmatpush.msra.mxu0 0.0
    %789 = vmatpush.msra.mxu0 0.0
    %790 = vmatpush.msra.mxu0 0.0
    %791 = vmatpush.msra.mxu0 0.0
    %792 = vmatpush.msra.mxu0 %v718
    %793 = vmatpush.msra.mxu0 %v716
    %794 = vmatpush.msra.mxu0 %v714
    %795 = vmatpush.msra.mxu0 %v712
    %796 = vmatmul.f32.gmra.mxu0 %v740
    %v797 = vpop.f32.mrf.mxu0
    %v798 = vadd.f32 %v722, %v797
    %799 = vmatmul.f32.gmra.mxu0 %v743
    %v800 = vpop.f32.mrf.mxu0
    %v801 = vadd.f32 %v727, %v800
    %802 = vmatmul.f32.gmra.mxu0 %v746
    %v803 = vpop.f32.mrf.mxu0
    %v804 = vadd.f32 %v732, %v803
    %805 = vmatmul.f32.gmra.mxu0 %v749
    %v806 = vpop.f32.mrf.mxu0
    %v807 = vadd.f32 %v737, %v806
    %808 = vdwg.mxu0
    %v809 = vadd.f32 %v547, %v769
    %v810 = vadd.f32 %v548, %v798
    %v811 = vadd.f32 %v549, %v772
    %v812 = vadd.f32 %v550, %v801
    %v813 = vadd.f32 %v551, %v775
    %v814 = vadd.f32 %v552, %v804
    %v815 = vadd.f32 %v553, %v778
    %v816 = vadd.f32 %v554, %v807
    %817 = vrot.lane.b32.xlu0 %v809, 4
    %v818 = vpop.permute.xlu0 %817
    %819 = vrot.lane.b32.xlu0 %v811, 4
    %v820 = vpop.permute.xlu0 %819
    %821 = vrot.lane.b32.xlu0 %v813, 4
    %v822 = vpop.permute.xlu0 %821
    %823 = vrot.lane.b32.xlu0 %v815, 4
    %v824 = vpop.permute.xlu0 %823
    %825 = vrot.lane.b32.xlu0 %v810, 4
    %v826 = vpop.permute.xlu0 %825
    %827 = vrot.lane.b32.xlu0 %v812, 4
    %v828 = vpop.permute.xlu0 %827
    %829 = vrot.lane.b32.xlu0 %v814, 4
    %v830 = vpop.permute.xlu0 %829
    %831 = vrot.lane.b32.xlu0 %v816, 4
    %v832 = vpop.permute.xlu0 %831
    %vm833 = vcmp.lt.s32.totalorder %v58, 4
    %v834 = vsel %vm833, %v818, %v826
    %v835 = vsel %vm833, %v820, %v828
    %v836 = vsel %vm833, %v822, %v830
    %v837 = vsel %vm833, %v824, %v832
    %v838 = vsel %vm833, %v826, %v818
    %v839 = vsel %vm833, %v828, %v820
    %v840 = vsel %vm833, %v830, %v822
    %v841 = vsel %vm833, %v832, %v824
    %v842 = vsel %vm122, %v838, 0.0
    %v843 = vsel %vm123, %v834, 0.0
    %v844 = vsel %vm122, %v839, 0.0
    %v845 = vsel %vm123, %v835, 0.0
    %v846 = vsel %vm122, %v840, 0.0
    %v847 = vsel %vm123, %v836, 0.0
    %v848 = vsel %vm122, %v841, 0.0
    %v849 = vsel %vm123, %v837, 0.0
    %850 = vrot.lane.b32.xlu0 %v809, 124
    %v851 = vpop.permute.xlu0 %850
    %852 = vrot.lane.b32.xlu0 %v811, 124
    %v853 = vpop.permute.xlu0 %852
    %854 = vrot.lane.b32.xlu0 %v813, 124
    %v855 = vpop.permute.xlu0 %854
    %856 = vrot.lane.b32.xlu0 %v815, 124
    %v857 = vpop.permute.xlu0 %856
    %858 = vrot.lane.b32.xlu0 %v810, 124
    %v859 = vpop.permute.xlu0 %858
    %860 = vrot.lane.b32.xlu0 %v812, 124
    %v861 = vpop.permute.xlu0 %860
    %862 = vrot.lane.b32.xlu0 %v814, 124
    %v863 = vpop.permute.xlu0 %862
    %864 = vrot.lane.b32.xlu0 %v816, 124
    %v865 = vpop.permute.xlu0 %864
    %vm866 = vcmp.lt.s32.totalorder %v58, 124
    %v867 = vsel %vm866, %v851, %v859
    %v868 = vsel %vm866, %v853, %v861
    %v869 = vsel %vm866, %v855, %v863
    %v870 = vsel %vm866, %v857, %v865
    %v871 = vsel %vm866, %v859, %v851
    %v872 = vsel %vm866, %v861, %v853
    %v873 = vsel %vm866, %v863, %v855
    %v874 = vsel %vm866, %v865, %v857
    %v875 = vsel %vm130, %v867, 0.0
    %v876 = vsel %vm131, %v871, 0.0
    %v877 = vsel %vm130, %v868, 0.0
    %v878 = vsel %vm131, %v872, 0.0
    %v879 = vsel %vm130, %v869, 0.0
    %v880 = vsel %vm131, %v873, 0.0
    %v881 = vsel %vm130, %v870, 0.0
    %v882 = vsel %vm131, %v874, 0.0
    %884 = vset.pattern.permute.xlu0 0
    %885 = vperm.xlu0 %884, %v161
    %v886 = vpop.permute.xlu0 %885
    %889 = vset.pattern.permute.xlu0 0
    %890 = vperm.xlu0 %889, %v162
    %v891 = vpop.permute.xlu0 %890
    %894 = vset.pattern.permute.xlu0 0
    %895 = vperm.xlu0 %894, %v163
    %v896 = vpop.permute.xlu0 %895
    %899 = vset.pattern.permute.xlu0 0
    %900 = vperm.xlu0 %899, %v164
    %v901 = vpop.permute.xlu0 %900
    %v904 = vsel %vm377, %v149, 0
    %v907 = vsel %vm377, %v150, 0
    %v910 = vsel %vm377, %v151, 0
    %v913 = vsel %vm377, %v152, 0
    %915 = vmatpush.msra.mxu0 0.0
    %916 = vmatpush.msra.mxu0 0.0
    %917 = vmatpush.msra.mxu0 0.0
    %918 = vmatpush.msra.mxu0 0.0
    %919 = vmatpush.msra.mxu0 %v881
    %920 = vmatpush.msra.mxu0 %v879
    %921 = vmatpush.msra.mxu0 %v877
    %922 = vmatpush.msra.mxu0 %v875
    %923 = vmatpush.msra.mxu0 %v815
    %924 = vmatpush.msra.mxu0 %v813
    %925 = vmatpush.msra.mxu0 %v811
    %926 = vmatpush.msra.mxu0 %v809
    %927 = vmatpush.msra.mxu0 %v848
    %928 = vmatpush.msra.mxu0 %v846
    %929 = vmatpush.msra.mxu0 %v844
    %930 = vmatpush.msra.mxu0 %v842
    %931 = vmatmul.f32.gmra.mxu0 %v904
    %v932 = vpop.f32.mrf.mxu0
    %v933 = vadd.f32 %v886, %v932
    %934 = vmatmul.f32.gmra.mxu0 %v907
    %v935 = vpop.f32.mrf.mxu0
    %v936 = vadd.f32 %v891, %v935
    %937 = vmatmul.f32.gmra.mxu0 %v910
    %v938 = vpop.f32.mrf.mxu0
    %v939 = vadd.f32 %v896, %v938
    %940 = vmatmul.f32.gmra.mxu0 %v913
    %v941 = vpop.f32.mrf.mxu0
    %v942 = vadd.f32 %v901, %v941
    %943 = vdwg.mxu0
    %944 = vmatpush.msra.mxu0 0.0
    %945 = vmatpush.msra.mxu0 0.0
    %946 = vmatpush.msra.mxu0 0.0
    %947 = vmatpush.msra.mxu0 0.0
    %948 = vmatpush.msra.mxu0 %v882
    %949 = vmatpush.msra.mxu0 %v880
    %950 = vmatpush.msra.mxu0 %v878
    %951 = vmatpush.msra.mxu0 %v876
    %952 = vmatpush.msra.mxu0 %v816
    %953 = vmatpush.msra.mxu0 %v814
    %954 = vmatpush.msra.mxu0 %v812
    %955 = vmatpush.msra.mxu0 %v810
    %956 = vmatpush.msra.mxu0 %v849
    %957 = vmatpush.msra.mxu0 %v847
    %958 = vmatpush.msra.mxu0 %v845
    %959 = vmatpush.msra.mxu0 %v843
    %960 = vmatmul.f32.gmra.mxu0 %v904
    %v961 = vpop.f32.mrf.mxu0
    %v962 = vadd.f32 %v886, %v961
    %963 = vmatmul.f32.gmra.mxu0 %v907
    %v964 = vpop.f32.mrf.mxu0
    %v965 = vadd.f32 %v891, %v964
    %966 = vmatmul.f32.gmra.mxu0 %v910
    %v967 = vpop.f32.mrf.mxu0
    %v968 = vadd.f32 %v896, %v967
    %969 = vmatmul.f32.gmra.mxu0 %v913
    %v970 = vpop.f32.mrf.mxu0
    %v971 = vadd.f32 %v901, %v970
    %972 = vdwg.mxu0
    %v973 = vmax.f32 %v933, 0.0
    %v974 = vmax.f32 %v962, 0.0
    %v975 = vmax.f32 %v936, 0.0
    %v976 = vmax.f32 %v965, 0.0
    %v977 = vmax.f32 %v939, 0.0
    %v978 = vmax.f32 %v968, 0.0
    %v979 = vmax.f32 %v942, 0.0
    %v980 = vmax.f32 %v971, 0.0
    %982 = vset.pattern.permute.xlu0 0
    %983 = vperm.xlu0 %982, %v185
    %v984 = vpop.permute.xlu0 %983
    %987 = vset.pattern.permute.xlu0 0
    %988 = vperm.xlu0 %987, %v186
    %v989 = vpop.permute.xlu0 %988
    %992 = vset.pattern.permute.xlu0 0
    %993 = vperm.xlu0 %992, %v187
    %v994 = vpop.permute.xlu0 %993
    %997 = vset.pattern.permute.xlu0 0
    %998 = vperm.xlu0 %997, %v188
    %v999 = vpop.permute.xlu0 %998
    %v1002 = vsel %vm476, %v173, 0
    %v1005 = vsel %vm476, %v174, 0
    %v1008 = vsel %vm476, %v175, 0
    %v1011 = vsel %vm476, %v176, 0
    %1013 = vmatpush.msra.mxu0 0.0
    %1014 = vmatpush.msra.mxu0 0.0
    %1015 = vmatpush.msra.mxu0 0.0
    %1016 = vmatpush.msra.mxu0 0.0
    %1017 = vmatpush.msra.mxu0 0.0
    %1018 = vmatpush.msra.mxu0 0.0
    %1019 = vmatpush.msra.mxu0 0.0
    %1020 = vmatpush.msra.mxu0 0.0
    %1021 = vmatpush.msra.mxu0 0.0
    %1022 = vmatpush.msra.mxu0 0.0
    %1023 = vmatpush.msra.mxu0 0.0
    %1024 = vmatpush.msra.mxu0 0.0
    %1025 = vmatpush.msra.mxu0 %v979
    %1026 = vmatpush.msra.mxu0 %v977
    %1027 = vmatpush.msra.mxu0 %v975
    %1028 = vmatpush.msra.mxu0 %v973
    %1029 = vmatmul.f32.gmra.mxu0 %v1002
    %v1030 = vpop.f32.mrf.mxu0
    %v1031 = vadd.f32 %v984, %v1030
    %1032 = vmatmul.f32.gmra.mxu0 %v1005
    %v1033 = vpop.f32.mrf.mxu0
    %v1034 = vadd.f32 %v989, %v1033
    %1035 = vmatmul.f32.gmra.mxu0 %v1008
    %v1036 = vpop.f32.mrf.mxu0
    %v1037 = vadd.f32 %v994, %v1036
    %1038 = vmatmul.f32.gmra.mxu0 %v1011
    %v1039 = vpop.f32.mrf.mxu0
    %v1040 = vadd.f32 %v999, %v1039
    %1041 = vdwg.mxu0
    %1042 = vmatpush.msra.mxu0 0.0
    %1043 = vmatpush.msra.mxu0 0.0
    %1044 = vmatpush.msra.mxu0 0.0
    %1045 = vmatpush.msra.mxu0 0.0
    %1046 = vmatpush.msra.mxu0 0.0
    %1047 = vmatpush.msra.mxu0 0.0
    %1048 = vmatpush.msra.mxu0 0.0
    %1049 = vmatpush.msra.mxu0 0.0
    %1050 = vmatpush.msra.mxu0 0.0
    %1051 = vmatpush.msra.mxu0 0.0
    %1052 = vmatpush.msra.mxu0 0.0
    %1053 = vmatpush.msra.mxu0 0.0
    %1054 = vmatpush.msra.mxu0 %v980
    %1055 = vmatpush.msra.mxu0 %v978
    %1056 = vmatpush.msra.mxu0 %v976
    %1057 = vmatpush.msra.mxu0 %v974
    %1058 = vmatmul.f32.gmra.mxu0 %v1002
    %v1059 = vpop.f32.mrf.mxu0
    %v1060 = vadd.f32 %v984, %v1059
    %1061 = vmatmul.f32.gmra.mxu0 %v1005
    %v1062 = vpop.f32.mrf.mxu0
    %v1063 = vadd.f32 %v989, %v1062
    %1064 = vmatmul.f32.gmra.mxu0 %v1008
    %v1065 = vpop.f32.mrf.mxu0
    %v1066 = vadd.f32 %v994, %v1065
    %1067 = vmatmul.f32.gmra.mxu0 %v1011
    %v1068 = vpop.f32.mrf.mxu0
    %v1069 = vadd.f32 %v999, %v1068
    %1070 = vdwg.mxu0
    %v1071 = vadd.f32 %v809, %v1031
    %v1072 = vadd.f32 %v810, %v1060
    %v1073 = vadd.f32 %v811, %v1034
    %v1074 = vadd.f32 %v812, %v1063
    %v1075 = vadd.f32 %v813, %v1037
    %v1076 = vadd.f32 %v814, %v1066
    %v1077 = vadd.f32 %v815, %v1040
    %v1078 = vadd.f32 %v816, %v1069
    %1080 = vset.pattern.permute.xlu0 0
    %1081 = vperm.xlu0 %1080, %v190
    %v1082 = vpop.permute.xlu0 %1081
    %v1085 = vsel %vm476, %v189, 0
    %1087 = vmatpush.msra.mxu0 0.0
    %1088 = vmatpush.msra.mxu0 0.0
    %1089 = vmatpush.msra.mxu0 0.0
    %1090 = vmatpush.msra.mxu0 0.0
    %1091 = vmatpush.msra.mxu0 0.0
    %1092 = vmatpush.msra.mxu0 0.0
    %1093 = vmatpush.msra.mxu0 0.0
    %1094 = vmatpush.msra.mxu0 0.0
    %1095 = vmatpush.msra.mxu0 0.0
    %1096 = vmatpush.msra.mxu0 0.0
    %1097 = vmatpush.msra.mxu0 0.0
    %1098 = vmatpush.msra.mxu0 0.0
    %1099 = vmatpush.msra.mxu0 %v1077
    %1100 = vmatpush.msra.mxu0 %v1075
    %1101 = vmatpush.msra.mxu0 %v1073
    %1102 = vmatpush.msra.mxu0 %v1071
    %1103 = vmatmul.f32.gmra.mxu0 %v1085
    %v1104 = vpop.f32.mrf.mxu0
    %v1105 = vadd.f32 %v1082, %v1104
    %1106 = vdwg.mxu0
    %1107 = vmatpush.msra.mxu0 0.0
    %1108 = vmatpush.msra.mxu0 0.0
    %1109 = vmatpush.msra.mxu0 0.0
    %1110 = vmatpush.msra.mxu0 0.0
    %1111 = vmatpush.msra.mxu0 0.0
    %1112 = vmatpush.msra.mxu0 0.0
    %1113 = vmatpush.msra.mxu0 0.0
    %1114 = vmatpush.msra.mxu0 0.0
    %1115 = vmatpush.msra.mxu0 0.0
    %1116 = vmatpush.msra.mxu0 0.0
    %1117 = vmatpush.msra.mxu0 0.0
    %1118 = vmatpush.msra.mxu0 0.0
    %1119 = vmatpush.msra.mxu0 %v1078
    %1120 = vmatpush.msra.mxu0 %v1076
    %1121 = vmatpush.msra.mxu0 %v1074
    %1122 = vmatpush.msra.mxu0 %v1072
    %1123 = vmatmul.f32.gmra.mxu0 %v1085
    %v1124 = vpop.f32.mrf.mxu0
    %v1125 = vadd.f32 %v1082, %v1124
    %1126 = vdwg.mxu0
    %1127 = vst [vmem:[#allocation2] sm:$0xff] %v1105
    %1128 = vst [vmem:[#allocation2 + $0x8] sm:$0xff] %v1125
    loop: start=0, step=1, limit=2
    $region70: #{tpu_custom_call.1} parent=1 // loop_pre_header
      _
    $region71: #{tpu_custom_call.1} parent=1 // loop_header
      %s1130 = sphi 0, %s1134
      %p1131 = scmp.ge.s32.totalorder %s1130, 2
      %v1135 = vphi %v1105, %v2163
      %v1136 = vphi %v1125, %v2183
    $region72: #{tpu_custom_call.1} parent=1 // loop_header_branch
      %1133 = sbr.rel (%p1131) target = $region76
    $region73: #{tpu_custom_call.1} parent=1 // loop_body
      %v1137 = vrot.slane %v1135, 4
      %v1138 = vmax.f32 %v1135, %v1137
      %v1139 = vrot.slane %v1138, 2
      %v1140 = vmax.f32 %v1138, %v1139
      %v1141 = vrot.slane %v1140, 1
      %v1142 = vmax.f32 %v1140, %v1141
      %v1143 = vrot.slane %v1136, 4
      %v1144 = vmax.f32 %v1136, %v1143
      %v1145 = vrot.slane %v1144, 2
      %v1146 = vmax.f32 %v1144, %v1145
      %v1147 = vrot.slane %v1146, 1
      %v1148 = vmax.f32 %v1146, %v1147
      %v1149 = vsub.f32 %v1135, %v1142
      %v1150 = vsub.f32 %v1136, %v1148
      %v1151 = vmul.f32 %v1149, 1.442695
      %v1152 = vpow.pop %v1151
      %v1153 = vmul.f32 %v1150, 1.442695
      %v1154 = vpow.pop %v1153
      %v1155 = vrot.slane %v1152, 4
      %v1156 = vadd.f32 %v1152, %v1155
      %v1157 = vrot.slane %v1156, 2
      %v1158 = vadd.f32 %v1156, %v1157
      %v1159 = vrot.slane %v1158, 1
      %v1160 = vadd.f32 %v1158, %v1159
      %v1161 = vrot.slane %v1154, 4
      %v1162 = vadd.f32 %v1154, %v1161
      %v1163 = vrot.slane %v1162, 2
      %v1164 = vadd.f32 %v1162, %v1163
      %v1165 = vrot.slane %v1164, 1
      %v1166 = vadd.f32 %v1164, %v1165
      %v1167 = vrcp.pop %v1160
      %v1168 = vmul.f32 %v1160, %v1167
      %v1169 = vsub.f32 1.0, %v1168
      %v1170 = vmul.f32 %v1167, %v1169
      %v1171 = vadd.f32 %v1167, %v1170
      %vm1172 = vweird.f32 %v1160
      %vm1173 = vweird.f32 %v1167
      %vm1174 = vmor %vm1172, %vm1173
      %v1175 = vsel %vm1174, %v1167, %v1171
      %v1176 = vand.u32 2147483647, %v1160
      %vm1177 = vcmp.eq.f32.partialorder %v1176, 8.507059e+37
      %v1178 = vand.u32 %v1160, 2147483648
      %v1179 = vor.u32 1.1754944e-38, %v1178
      %v1180 = vsel %vm1177, %v1179, %v1175
      %v1181 = vmul.f32 %v1152, %v1180
      %v1182 = vrcp.pop %v1166
      %v1183 = vmul.f32 %v1166, %v1182
      %v1184 = vsub.f32 1.0, %v1183
      %v1185 = vmul.f32 %v1182, %v1184
      %v1186 = vadd.f32 %v1182, %v1185
      %vm1187 = vweird.f32 %v1166
      %vm1188 = vweird.f32 %v1182
      %vm1189 = vmor %vm1187, %vm1188
      %v1190 = vsel %vm1189, %v1182, %v1186
      %v1191 = vand.u32 2147483647, %v1166
      %vm1192 = vcmp.eq.f32.partialorder %v1191, 8.507059e+37
      %v1193 = vand.u32 %v1166, 2147483648
      %v1194 = vor.u32 1.1754944e-38, %v1193
      %v1195 = vsel %vm1192, %v1194, %v1190
      %v1196 = vmul.f32 %v1154, %v1195
      %s1197 = smul.u32 %s1130, 32
      %s1198 = scalar_lea.vmem %s9, %s1197
      %v1199 = vld [vmem:[%s1198] sm:$0xff]
      %v1200 = vld [vmem:[%s1198 + $0x8] sm:$0xff]
      %v1201 = vld [vmem:[%s1198 + $0x10] sm:$0xff]
      %v1202 = vld [vmem:[%s1198 + $0x18] sm:$0xff]
      %s1203 = scalar_lea.vmem %s10, %s1197
      %v1204 = vld [vmem:[%s1203] sm:$0xff]
      %v1205 = vld [vmem:[%s1203 + $0x8] sm:$0xff]
      %v1206 = vld [vmem:[%s1203 + $0x10] sm:$0xff]
      %v1207 = vld [vmem:[%s1203 + $0x18] sm:$0xff]
      %s1208 = smul.u32 %s1130, 96
      %s1209 = scalar_lea.vmem %s11, %s1208
      %v1210 = vld [vmem:[%s1209] sm:$0xff]
      %v1211 = vld [vmem:[%s1209 + $0x8] sm:$0xff]
      %v1212 = vld [vmem:[%s1209 + $0x10] sm:$0xff]
      %v1213 = vld [vmem:[%s1209 + $0x18] sm:$0xff]
      %v1214 = vld [vmem:[%s1209 + $0x20] sm:$0xff]
      %v1215 = vld [vmem:[%s1209 + $0x28] sm:$0xff]
      %v1216 = vld [vmem:[%s1209 + $0x30] sm:$0xff]
      %v1217 = vld [vmem:[%s1209 + $0x38] sm:$0xff]
      %v1218 = vld [vmem:[%s1209 + $0x40] sm:$0xff]
      %v1219 = vld [vmem:[%s1209 + $0x48] sm:$0xff]
      %v1220 = vld [vmem:[%s1209 + $0x50] sm:$0xff]
      %v1221 = vld [vmem:[%s1209 + $0x58] sm:$0xff]
      %s1222 = scalar_lea.vmem %s12, %s1208
      %v1223 = vld [vmem:[%s1222] sm:$0xff]
      %v1224 = vld [vmem:[%s1222 + $0x8] sm:$0xff]
      %v1225 = vld [vmem:[%s1222 + $0x10] sm:$0xff]
      %v1226 = vld [vmem:[%s1222 + $0x18] sm:$0xff]
      %v1227 = vld [vmem:[%s1222 + $0x20] sm:$0xff]
      %v1228 = vld [vmem:[%s1222 + $0x28] sm:$0xff]
      %v1229 = vld [vmem:[%s1222 + $0x30] sm:$0xff]
      %v1230 = vld [vmem:[%s1222 + $0x38] sm:$0xff]
      %v1231 = vld [vmem:[%s1222 + $0x40] sm:$0xff]
      %v1232 = vld [vmem:[%s1222 + $0x48] sm:$0xff]
      %v1233 = vld [vmem:[%s1222 + $0x50] sm:$0xff]
      %v1234 = vld [vmem:[%s1222 + $0x58] sm:$0xff]
      %s1235 = scalar_lea.vmem %s13, %s1208
      %v1236 = vld [vmem:[%s1235] sm:$0xff]
      %v1237 = vld [vmem:[%s1235 + $0x8] sm:$0xff]
      %v1238 = vld [vmem:[%s1235 + $0x10] sm:$0xff]
      %v1239 = vld [vmem:[%s1235 + $0x18] sm:$0xff]
      %v1240 = vld [vmem:[%s1235 + $0x20] sm:$0xff]
      %v1241 = vld [vmem:[%s1235 + $0x28] sm:$0xff]
      %v1242 = vld [vmem:[%s1235 + $0x30] sm:$0xff]
      %v1243 = vld [vmem:[%s1235 + $0x38] sm:$0xff]
      %v1244 = vld [vmem:[%s1235 + $0x40] sm:$0xff]
      %v1245 = vld [vmem:[%s1235 + $0x48] sm:$0xff]
      %v1246 = vld [vmem:[%s1235 + $0x50] sm:$0xff]
      %v1247 = vld [vmem:[%s1235 + $0x58] sm:$0xff]
      %s1248 = scalar_lea.vmem %s14, %s1208
      %v1249 = vld [vmem:[%s1248] sm:$0xff]
      %v1250 = vld [vmem:[%s1248 + $0x8] sm:$0xff]
      %v1251 = vld [vmem:[%s1248 + $0x10] sm:$0xff]
      %v1252 = vld [vmem:[%s1248 + $0x18] sm:$0xff]
      %v1253 = vld [vmem:[%s1248 + $0x20] sm:$0xff]
      %v1254 = vld [vmem:[%s1248 + $0x28] sm:$0xff]
      %v1255 = vld [vmem:[%s1248 + $0x30] sm:$0xff]
      %v1256 = vld [vmem:[%s1248 + $0x38] sm:$0xff]
      %v1257 = vld [vmem:[%s1248 + $0x40] sm:$0xff]
      %v1258 = vld [vmem:[%s1248 + $0x48] sm:$0xff]
      %v1259 = vld [vmem:[%s1248 + $0x50] sm:$0xff]
      %v1260 = vld [vmem:[%s1248 + $0x58] sm:$0xff]
      %s1261 = smul.u32 %s1130, 8
      %s1262 = scalar_lea.vmem %s15, %s1261
      %v1263 = vld [vmem:[%s1262] sm:$0xff]
      %s1264 = scalar_lea.vmem %s16, %s1261
      %v1265 = vld [vmem:[%s1264] sm:$0xff]
      %1267 = vset.pattern.permute.xlu0 0
      %1268 = vperm.xlu0 %1267, %v1204
      %v1269 = vpop.permute.xlu0 %1268
      %1272 = vset.pattern.permute.xlu0 0
      %1273 = vperm.xlu0 %1272, %v1205
      %v1274 = vpop.permute.xlu0 %1273
      %1277 = vset.pattern.permute.xlu0 0
      %1278 = vperm.xlu0 %1277, %v1206
      %v1279 = vpop.permute.xlu0 %1278
      %1282 = vset.pattern.permute.xlu0 0
      %1283 = vperm.xlu0 %1282, %v1207
      %v1284 = vpop.permute.xlu0 %1283
      %vm1286 = vcmask 64512
      %v1288 = vsel %vm1286, %v1199, 0
      %v1291 = vsel %vm1286, %v1200, 0
      %v1294 = vsel %vm1286, %v1201, 0
      %v1297 = vsel %vm1286, %v1202, 0
      %1299 = vmatpush.msra.mxu0 0.0
      %1300 = vmatpush.msra.mxu0 0.0
      %1301 = vmatpush.msra.mxu0 0.0
      %1302 = vmatpush.msra.mxu0 0.0
      %1303 = vmatpush.msra.mxu0 0.0
      %1304 = vmatpush.msra.mxu0 0.0
      %1305 = vmatpush.msra.mxu0 0.0
      %1306 = vmatpush.msra.mxu0 0.0
      %1307 = vmatpush.msra.mxu0 0.0
      %1308 = vmatpush.msra.mxu0 0.0
      %1309 = vmatpush.msra.mxu0 0.0
      %1310 = vmatpush.msra.mxu0 0.0
      %1311 = vmatpush.msra.mxu0 0.0
      %1312 = vmatpush.msra.mxu0 0.0
      %1313 = vmatpush.msra.mxu0 0.0
      %1314 = vmatpush.msra.mxu0 %v1181
      %1315 = vmatmul.f32.gmra.mxu0 %v1288
      %v1316 = vpop.f32.mrf.mxu0
      %v1317 = vadd.f32 %v1269, %v1316
      %1318 = vmatmul.f32.gmra.mxu0 %v1291
      %v1319 = vpop.f32.mrf.mxu0
      %v1320 = vadd.f32 %v1274, %v1319
      %1321 = vmatmul.f32.gmra.mxu0 %v1294
      %v1322 = vpop.f32.mrf.mxu0
      %v1323 = vadd.f32 %v1279, %v1322
      %1324 = vmatmul.f32.gmra.mxu0 %v1297
      %v1325 = vpop.f32.mrf.mxu0
      %v1326 = vadd.f32 %v1284, %v1325
      %1327 = vdwg.mxu0
      %1328 = vmatpush.msra.mxu0 0.0
      %1329 = vmatpush.msra.mxu0 0.0
      %1330 = vmatpush.msra.mxu0 0.0
      %1331 = vmatpush.msra.mxu0 0.0
      %1332 = vmatpush.msra.mxu0 0.0
      %1333 = vmatpush.msra.mxu0 0.0
      %1334 = vmatpush.msra.mxu0 0.0
      %1335 = vmatpush.msra.mxu0 0.0
      %1336 = vmatpush.msra.mxu0 0.0
      %1337 = vmatpush.msra.mxu0 0.0
      %1338 = vmatpush.msra.mxu0 0.0
      %1339 = vmatpush.msra.mxu0 0.0
      %1340 = vmatpush.msra.mxu0 0.0
      %1341 = vmatpush.msra.mxu0 0.0
      %1342 = vmatpush.msra.mxu0 0.0
      %1343 = vmatpush.msra.mxu0 %v1196
      %1344 = vmatmul.f32.gmra.mxu0 %v1288
      %v1345 = vpop.f32.mrf.mxu0
      %v1346 = vadd.f32 %v1269, %v1345
      %1347 = vmatmul.f32.gmra.mxu0 %v1291
      %v1348 = vpop.f32.mrf.mxu0
      %v1349 = vadd.f32 %v1274, %v1348
      %1350 = vmatmul.f32.gmra.mxu0 %v1294
      %v1351 = vpop.f32.mrf.mxu0
      %v1352 = vadd.f32 %v1279, %v1351
      %1353 = vmatmul.f32.gmra.mxu0 %v1297
      %v1354 = vpop.f32.mrf.mxu0
      %v1355 = vadd.f32 %v1284, %v1354
      %1356 = vdwg.mxu0
      %1357 = vrot.lane.b32.xlu0 %v1317, 1
      %v1358 = vpop.permute.xlu0 %1357
      %1359 = vrot.lane.b32.xlu0 %v1320, 1
      %v1360 = vpop.permute.xlu0 %1359
      %1361 = vrot.lane.b32.xlu0 %v1323, 1
      %v1362 = vpop.permute.xlu0 %1361
      %1363 = vrot.lane.b32.xlu0 %v1326, 1
      %v1364 = vpop.permute.xlu0 %1363
      %1365 = vrot.lane.b32.xlu0 %v1346, 1
      %v1366 = vpop.permute.xlu0 %1365
      %1367 = vrot.lane.b32.xlu0 %v1349, 1
      %v1368 = vpop.permute.xlu0 %1367
      %1369 = vrot.lane.b32.xlu0 %v1352, 1
      %v1370 = vpop.permute.xlu0 %1369
      %1371 = vrot.lane.b32.xlu0 %v1355, 1
      %v1372 = vpop.permute.xlu0 %1371
      %v1373 = vsel %vm307, %v1358, %v1366
      %v1374 = vsel %vm307, %v1360, %v1368
      %v1375 = vsel %vm307, %v1362, %v1370
      %v1376 = vsel %vm307, %v1364, %v1372
      %v1377 = vsel %vm307, %v1366, %v1358
      %v1378 = vsel %vm307, %v1368, %v1360
      %v1379 = vsel %vm307, %v1370, %v1362
      %v1380 = vsel %vm307, %v1372, %v1364
      %v1381 = vsel %vm90, %v1377, 0.0
      %v1382 = vsel %vm91, %v1373, 0.0
      %v1383 = vsel %vm90, %v1378, 0.0
      %v1384 = vsel %vm91, %v1374, 0.0
      %v1385 = vsel %vm90, %v1379, 0.0
      %v1386 = vsel %vm91, %v1375, 0.0
      %v1387 = vsel %vm90, %v1380, 0.0
      %v1388 = vsel %vm91, %v1376, 0.0
      %1389 = vrot.lane.b32.xlu0 %v1317, 127
      %v1390 = vpop.permute.xlu0 %1389
      %1391 = vrot.lane.b32.xlu0 %v1320, 127
      %v1392 = vpop.permute.xlu0 %1391
      %1393 = vrot.lane.b32.xlu0 %v1323, 127
      %v1394 = vpop.permute.xlu0 %1393
      %1395 = vrot.lane.b32.xlu0 %v1326, 127
      %v1396 = vpop.permute.xlu0 %1395
      %1397 = vrot.lane.b32.xlu0 %v1346, 127
      %v1398 = vpop.permute.xlu0 %1397
      %1399 = vrot.lane.b32.xlu0 %v1349, 127
      %v1400 = vpop.permute.xlu0 %1399
      %1401 = vrot.lane.b32.xlu0 %v1352, 127
      %v1402 = vpop.permute.xlu0 %1401
      %1403 = vrot.lane.b32.xlu0 %v1355, 127
      %v1404 = vpop.permute.xlu0 %1403
      %v1405 = vsel %vm340, %v1390, %v1398
      %v1406 = vsel %vm340, %v1392, %v1400
      %v1407 = vsel %vm340, %v1394, %v1402
      %v1408 = vsel %vm340, %v1396, %v1404
      %v1409 = vsel %vm340, %v1398, %v1390
      %v1410 = vsel %vm340, %v1400, %v1392
      %v1411 = vsel %vm340, %v1402, %v1394
      %v1412 = vsel %vm340, %v1404, %v1396
      %v1413 = vsel %vm98, %v1405, 0.0
      %v1414 = vsel %vm99, %v1409, 0.0
      %v1415 = vsel %vm98, %v1406, 0.0
      %v1416 = vsel %vm99, %v1410, 0.0
      %v1417 = vsel %vm98, %v1407, 0.0
      %v1418 = vsel %vm99, %v1411, 0.0
      %v1419 = vsel %vm98, %v1408, 0.0
      %v1420 = vsel %vm99, %v1412, 0.0
      %1422 = vset.pattern.permute.xlu0 0
      %1423 = vperm.xlu0 %1422, %v1223
      %v1424 = vpop.permute.xlu0 %1423
      %1427 = vset.pattern.permute.xlu0 0
      %1428 = vperm.xlu0 %1427, %v1224
      %v1429 = vpop.permute.xlu0 %1428
      %1432 = vset.pattern.permute.xlu0 0
      %1433 = vperm.xlu0 %1432, %v1225
      %v1434 = vpop.permute.xlu0 %1433
      %1437 = vset.pattern.permute.xlu0 0
      %1438 = vperm.xlu0 %1437, %v1226
      %v1439 = vpop.permute.xlu0 %1438
      %v1442 = vsel %vm377, %v1210, 0
      %v1445 = vsel %vm377, %v1211, 0
      %v1448 = vsel %vm377, %v1212, 0
      %v1451 = vsel %vm377, %v1213, 0
      %1453 = vmatpush.msra.mxu0 0.0
      %1454 = vmatpush.msra.mxu0 0.0
      %1455 = vmatpush.msra.mxu0 0.0
      %1456 = vmatpush.msra.mxu0 0.0
      %1457 = vmatpush.msra.mxu0 %v1419
      %1458 = vmatpush.msra.mxu0 %v1417
      %1459 = vmatpush.msra.mxu0 %v1415
      %1460 = vmatpush.msra.mxu0 %v1413
      %1461 = vmatpush.msra.mxu0 %v1326
      %1462 = vmatpush.msra.mxu0 %v1323
      %1463 = vmatpush.msra.mxu0 %v1320
      %1464 = vmatpush.msra.mxu0 %v1317
      %1465 = vmatpush.msra.mxu0 %v1387
      %1466 = vmatpush.msra.mxu0 %v1385
      %1467 = vmatpush.msra.mxu0 %v1383
      %1468 = vmatpush.msra.mxu0 %v1381
      %1469 = vmatmul.f32.gmra.mxu0 %v1442
      %v1470 = vpop.f32.mrf.mxu0
      %v1471 = vadd.f32 %v1424, %v1470
      %1472 = vmatmul.f32.gmra.mxu0 %v1445
      %v1473 = vpop.f32.mrf.mxu0
      %v1474 = vadd.f32 %v1429, %v1473
      %1475 = vmatmul.f32.gmra.mxu0 %v1448
      %v1476 = vpop.f32.mrf.mxu0
      %v1477 = vadd.f32 %v1434, %v1476
      %1478 = vmatmul.f32.gmra.mxu0 %v1451
      %v1479 = vpop.f32.mrf.mxu0
      %v1480 = vadd.f32 %v1439, %v1479
      %1481 = vdwg.mxu0
      %1482 = vmatpush.msra.mxu0 0.0
      %1483 = vmatpush.msra.mxu0 0.0
      %1484 = vmatpush.msra.mxu0 0.0
      %1485 = vmatpush.msra.mxu0 0.0
      %1486 = vmatpush.msra.mxu0 %v1420
      %1487 = vmatpush.msra.mxu0 %v1418
      %1488 = vmatpush.msra.mxu0 %v1416
      %1489 = vmatpush.msra.mxu0 %v1414
      %1490 = vmatpush.msra.mxu0 %v1355
      %1491 = vmatpush.msra.mxu0 %v1352
      %1492 = vmatpush.msra.mxu0 %v1349
      %1493 = vmatpush.msra.mxu0 %v1346
      %1494 = vmatpush.msra.mxu0 %v1388
      %1495 = vmatpush.msra.mxu0 %v1386
      %1496 = vmatpush.msra.mxu0 %v1384
      %1497 = vmatpush.msra.mxu0 %v1382
      %1498 = vmatmul.f32.gmra.mxu0 %v1442
      %v1499 = vpop.f32.mrf.mxu0
      %v1500 = vadd.f32 %v1424, %v1499
      %1501 = vmatmul.f32.gmra.mxu0 %v1445
      %v1502 = vpop.f32.mrf.mxu0
      %v1503 = vadd.f32 %v1429, %v1502
      %1504 = vmatmul.f32.gmra.mxu0 %v1448
      %v1505 = vpop.f32.mrf.mxu0
      %v1506 = vadd.f32 %v1434, %v1505
      %1507 = vmatmul.f32.gmra.mxu0 %v1451
      %v1508 = vpop.f32.mrf.mxu0
      %v1509 = vadd.f32 %v1439, %v1508
      %1510 = vdwg.mxu0
      %v1511 = vmax.f32 %v1471, 0.0
      %v1512 = vmax.f32 %v1500, 0.0
      %v1513 = vmax.f32 %v1474, 0.0
      %v1514 = vmax.f32 %v1503, 0.0
      %v1515 = vmax.f32 %v1477, 0.0
      %v1516 = vmax.f32 %v1506, 0.0
      %v1517 = vmax.f32 %v1480, 0.0
      %v1518 = vmax.f32 %v1509, 0.0
      %1520 = vset.pattern.permute.xlu0 0
      %1521 = vperm.xlu0 %1520, %v1249
      %v1522 = vpop.permute.xlu0 %1521
      %1525 = vset.pattern.permute.xlu0 0
      %1526 = vperm.xlu0 %1525, %v1250
      %v1527 = vpop.permute.xlu0 %1526
      %1530 = vset.pattern.permute.xlu0 0
      %1531 = vperm.xlu0 %1530, %v1251
      %v1532 = vpop.permute.xlu0 %1531
      %1535 = vset.pattern.permute.xlu0 0
      %1536 = vperm.xlu0 %1535, %v1252
      %v1537 = vpop.permute.xlu0 %1536
      %v1540 = vsel %vm476, %v1236, 0
      %v1543 = vsel %vm476, %v1237, 0
      %v1546 = vsel %vm476, %v1238, 0
      %v1549 = vsel %vm476, %v1239, 0
      %1551 = vmatpush.msra.mxu0 0.0
      %1552 = vmatpush.msra.mxu0 0.0
      %1553 = vmatpush.msra.mxu0 0.0
      %1554 = vmatpush.msra.mxu0 0.0
      %1555 = vmatpush.msra.mxu0 0.0
      %1556 = vmatpush.msra.mxu0 0.0
      %1557 = vmatpush.msra.mxu0 0.0
      %1558 = vmatpush.msra.mxu0 0.0
      %1559 = vmatpush.msra.mxu0 0.0
      %1560 = vmatpush.msra.mxu0 0.0
      %1561 = vmatpush.msra.mxu0 0.0
      %1562 = vmatpush.msra.mxu0 0.0
      %1563 = vmatpush.msra.mxu0 %v1517
      %1564 = vmatpush.msra.mxu0 %v1515
      %1565 = vmatpush.msra.mxu0 %v1513
      %1566 = vmatpush.msra.mxu0 %v1511
      %1567 = vmatmul.f32.gmra.mxu0 %v1540
      %v1568 = vpop.f32.mrf.mxu0
      %v1569 = vadd.f32 %v1522, %v1568
      %1570 = vmatmul.f32.gmra.mxu0 %v1543
      %v1571 = vpop.f32.mrf.mxu0
      %v1572 = vadd.f32 %v1527, %v1571
      %1573 = vmatmul.f32.gmra.mxu0 %v1546
      %v1574 = vpop.f32.mrf.mxu0
      %v1575 = vadd.f32 %v1532, %v1574
      %1576 = vmatmul.f32.gmra.mxu0 %v1549
      %v1577 = vpop.f32.mrf.mxu0
      %v1578 = vadd.f32 %v1537, %v1577
      %1579 = vdwg.mxu0
      %1580 = vmatpush.msra.mxu0 0.0
      %1581 = vmatpush.msra.mxu0 0.0
      %1582 = vmatpush.msra.mxu0 0.0
      %1583 = vmatpush.msra.mxu0 0.0
      %1584 = vmatpush.msra.mxu0 0.0
      %1585 = vmatpush.msra.mxu0 0.0
      %1586 = vmatpush.msra.mxu0 0.0
      %1587 = vmatpush.msra.mxu0 0.0
      %1588 = vmatpush.msra.mxu0 0.0
      %1589 = vmatpush.msra.mxu0 0.0
      %1590 = vmatpush.msra.mxu0 0.0
      %1591 = vmatpush.msra.mxu0 0.0
      %1592 = vmatpush.msra.mxu0 %v1518
      %1593 = vmatpush.msra.mxu0 %v1516
      %1594 = vmatpush.msra.mxu0 %v1514
      %1595 = vmatpush.msra.mxu0 %v1512
      %1596 = vmatmul.f32.gmra.mxu0 %v1540
      %v1597 = vpop.f32.mrf.mxu0
      %v1598 = vadd.f32 %v1522, %v1597
      %1599 = vmatmul.f32.gmra.mxu0 %v1543
      %v1600 = vpop.f32.mrf.mxu0
      %v1601 = vadd.f32 %v1527, %v1600
      %1602 = vmatmul.f32.gmra.mxu0 %v1546
      %v1603 = vpop.f32.mrf.mxu0
      %v1604 = vadd.f32 %v1532, %v1603
      %1605 = vmatmul.f32.gmra.mxu0 %v1549
      %v1606 = vpop.f32.mrf.mxu0
      %v1607 = vadd.f32 %v1537, %v1606
      %1608 = vdwg.mxu0
      %v1609 = vadd.f32 %v1317, %v1569
      %v1610 = vadd.f32 %v1346, %v1598
      %v1611 = vadd.f32 %v1320, %v1572
      %v1612 = vadd.f32 %v1349, %v1601
      %v1613 = vadd.f32 %v1323, %v1575
      %v1614 = vadd.f32 %v1352, %v1604
      %v1615 = vadd.f32 %v1326, %v1578
      %v1616 = vadd.f32 %v1355, %v1607
      %1617 = vrot.lane.b32.xlu0 %v1609, 2
      %v1618 = vpop.permute.xlu0 %1617
      %1619 = vrot.lane.b32.xlu0 %v1611, 2
      %v1620 = vpop.permute.xlu0 %1619
      %1621 = vrot.lane.b32.xlu0 %v1613, 2
      %v1622 = vpop.permute.xlu0 %1621
      %1623 = vrot.lane.b32.xlu0 %v1615, 2
      %v1624 = vpop.permute.xlu0 %1623
      %1625 = vrot.lane.b32.xlu0 %v1610, 2
      %v1626 = vpop.permute.xlu0 %1625
      %1627 = vrot.lane.b32.xlu0 %v1612, 2
      %v1628 = vpop.permute.xlu0 %1627
      %1629 = vrot.lane.b32.xlu0 %v1614, 2
      %v1630 = vpop.permute.xlu0 %1629
      %1631 = vrot.lane.b32.xlu0 %v1616, 2
      %v1632 = vpop.permute.xlu0 %1631
      %v1633 = vsel %vm571, %v1618, %v1626
      %v1634 = vsel %vm571, %v1620, %v1628
      %v1635 = vsel %vm571, %v1622, %v1630
      %v1636 = vsel %vm571, %v1624, %v1632
      %v1637 = vsel %vm571, %v1626, %v1618
      %v1638 = vsel %vm571, %v1628, %v1620
      %v1639 = vsel %vm571, %v1630, %v1622
      %v1640 = vsel %vm571, %v1632, %v1624
      %v1641 = vsel %vm106, %v1637, 0.0
      %v1642 = vsel %vm107, %v1633, 0.0
      %v1643 = vsel %vm106, %v1638, 0.0
      %v1644 = vsel %vm107, %v1634, 0.0
      %v1645 = vsel %vm106, %v1639, 0.0
      %v1646 = vsel %vm107, %v1635, 0.0
      %v1647 = vsel %vm106, %v1640, 0.0
      %v1648 = vsel %vm107, %v1636, 0.0
      %1649 = vrot.lane.b32.xlu0 %v1609, 126
      %v1650 = vpop.permute.xlu0 %1649
      %1651 = vrot.lane.b32.xlu0 %v1611, 126
      %v1652 = vpop.permute.xlu0 %1651
      %1653 = vrot.lane.b32.xlu0 %v1613, 126
      %v1654 = vpop.permute.xlu0 %1653
      %1655 = vrot.lane.b32.xlu0 %v1615, 126
      %v1656 = vpop.permute.xlu0 %1655
      %1657 = vrot.lane.b32.xlu0 %v1610, 126
      %v1658 = vpop.permute.xlu0 %1657
      %1659 = vrot.lane.b32.xlu0 %v1612, 126
      %v1660 = vpop.permute.xlu0 %1659
      %1661 = vrot.lane.b32.xlu0 %v1614, 126
      %v1662 = vpop.permute.xlu0 %1661
      %1663 = vrot.lane.b32.xlu0 %v1616, 126
      %v1664 = vpop.permute.xlu0 %1663
      %v1665 = vsel %vm604, %v1650, %v1658
      %v1666 = vsel %vm604, %v1652, %v1660
      %v1667 = vsel %vm604, %v1654, %v1662
      %v1668 = vsel %vm604, %v1656, %v1664
      %v1669 = vsel %vm604, %v1658, %v1650
      %v1670 = vsel %vm604, %v1660, %v1652
      %v1671 = vsel %vm604, %v1662, %v1654
      %v1672 = vsel %vm604, %v1664, %v1656
      %v1673 = vsel %vm114, %v1665, 0.0
      %v1674 = vsel %vm115, %v1669, 0.0
      %v1675 = vsel %vm114, %v1666, 0.0
      %v1676 = vsel %vm115, %v1670, 0.0
      %v1677 = vsel %vm114, %v1667, 0.0
      %v1678 = vsel %vm115, %v1671, 0.0
      %v1679 = vsel %vm114, %v1668, 0.0
      %v1680 = vsel %vm115, %v1672, 0.0
      %1682 = vset.pattern.permute.xlu0 0
      %1683 = vperm.xlu0 %1682, %v1227
      %v1684 = vpop.permute.xlu0 %1683
      %1687 = vset.pattern.permute.xlu0 0
      %1688 = vperm.xlu0 %1687, %v1228
      %v1689 = vpop.permute.xlu0 %1688
      %1692 = vset.pattern.permute.xlu0 0
      %1693 = vperm.xlu0 %1692, %v1229
      %v1694 = vpop.permute.xlu0 %1693
      %1697 = vset.pattern.permute.xlu0 0
      %1698 = vperm.xlu0 %1697, %v1230
      %v1699 = vpop.permute.xlu0 %1698
      %v1702 = vsel %vm377, %v1214, 0
      %v1705 = vsel %vm377, %v1215, 0
      %v1708 = vsel %vm377, %v1216, 0
      %v1711 = vsel %vm377, %v1217, 0
      %1713 = vmatpush.msra.mxu0 0.0
      %1714 = vmatpush.msra.mxu0 0.0
      %1715 = vmatpush.msra.mxu0 0.0
      %1716 = vmatpush.msra.mxu0 0.0
      %1717 = vmatpush.msra.mxu0 %v1679
      %1718 = vmatpush.msra.mxu0 %v1677
      %1719 = vmatpush.msra.mxu0 %v1675
      %1720 = vmatpush.msra.mxu0 %v1673
      %1721 = vmatpush.msra.mxu0 %v1615
      %1722 = vmatpush.msra.mxu0 %v1613
      %1723 = vmatpush.msra.mxu0 %v1611
      %1724 = vmatpush.msra.mxu0 %v1609
      %1725 = vmatpush.msra.mxu0 %v1647
      %1726 = vmatpush.msra.mxu0 %v1645
      %1727 = vmatpush.msra.mxu0 %v1643
      %1728 = vmatpush.msra.mxu0 %v1641
      %1729 = vmatmul.f32.gmra.mxu0 %v1702
      %v1730 = vpop.f32.mrf.mxu0
      %v1731 = vadd.f32 %v1684, %v1730
      %1732 = vmatmul.f32.gmra.mxu0 %v1705
      %v1733 = vpop.f32.mrf.mxu0
      %v1734 = vadd.f32 %v1689, %v1733
      %1735 = vmatmul.f32.gmra.mxu0 %v1708
      %v1736 = vpop.f32.mrf.mxu0
      %v1737 = vadd.f32 %v1694, %v1736
      %1738 = vmatmul.f32.gmra.mxu0 %v1711
      %v1739 = vpop.f32.mrf.mxu0
      %v1740 = vadd.f32 %v1699, %v1739
      %1741 = vdwg.mxu0
      %1742 = vmatpush.msra.mxu0 0.0
      %1743 = vmatpush.msra.mxu0 0.0
      %1744 = vmatpush.msra.mxu0 0.0
      %1745 = vmatpush.msra.mxu0 0.0
      %1746 = vmatpush.msra.mxu0 %v1680
      %1747 = vmatpush.msra.mxu0 %v1678
      %1748 = vmatpush.msra.mxu0 %v1676
      %1749 = vmatpush.msra.mxu0 %v1674
      %1750 = vmatpush.msra.mxu0 %v1616
      %1751 = vmatpush.msra.mxu0 %v1614
      %1752 = vmatpush.msra.mxu0 %v1612
      %1753 = vmatpush.msra.mxu0 %v1610
      %1754 = vmatpush.msra.mxu0 %v1648
      %1755 = vmatpush.msra.mxu0 %v1646
      %1756 = vmatpush.msra.mxu0 %v1644
      %1757 = vmatpush.msra.mxu0 %v1642
      %1758 = vmatmul.f32.gmra.mxu0 %v1702
      %v1759 = vpop.f32.mrf.mxu0
      %v1760 = vadd.f32 %v1684, %v1759
      %1761 = vmatmul.f32.gmra.mxu0 %v1705
      %v1762 = vpop.f32.mrf.mxu0
      %v1763 = vadd.f32 %v1689, %v1762
      %1764 = vmatmul.f32.gmra.mxu0 %v1708
      %v1765 = vpop.f32.mrf.mxu0
      %v1766 = vadd.f32 %v1694, %v1765
      %1767 = vmatmul.f32.gmra.mxu0 %v1711
      %v1768 = vpop.f32.mrf.mxu0
      %v1769 = vadd.f32 %v1699, %v1768
      %1770 = vdwg.mxu0
      %v1771 = vmax.f32 %v1731, 0.0
      %v1772 = vmax.f32 %v1760, 0.0
      %v1773 = vmax.f32 %v1734, 0.0
      %v1774 = vmax.f32 %v1763, 0.0
      %v1775 = vmax.f32 %v1737, 0.0
      %v1776 = vmax.f32 %v1766, 0.0
      %v1777 = vmax.f32 %v1740, 0.0
      %v1778 = vmax.f32 %v1769, 0.0
      %1780 = vset.pattern.permute.xlu0 0
      %1781 = vperm.xlu0 %1780, %v1253
      %v1782 = vpop.permute.xlu0 %1781
      %1785 = vset.pattern.permute.xlu0 0
      %1786 = vperm.xlu0 %1785, %v1254
      %v1787 = vpop.permute.xlu0 %1786
      %1790 = vset.pattern.permute.xlu0 0
      %1791 = vperm.xlu0 %1790, %v1255
      %v1792 = vpop.permute.xlu0 %1791
      %1795 = vset.pattern.permute.xlu0 0
      %1796 = vperm.xlu0 %1795, %v1256
      %v1797 = vpop.permute.xlu0 %1796
      %v1800 = vsel %vm476, %v1240, 0
      %v1803 = vsel %vm476, %v1241, 0
      %v1806 = vsel %vm476, %v1242, 0
      %v1809 = vsel %vm476, %v1243, 0
      %1811 = vmatpush.msra.mxu0 0.0
      %1812 = vmatpush.msra.mxu0 0.0
      %1813 = vmatpush.msra.mxu0 0.0
      %1814 = vmatpush.msra.mxu0 0.0
      %1815 = vmatpush.msra.mxu0 0.0
      %1816 = vmatpush.msra.mxu0 0.0
      %1817 = vmatpush.msra.mxu0 0.0
      %1818 = vmatpush.msra.mxu0 0.0
      %1819 = vmatpush.msra.mxu0 0.0
      %1820 = vmatpush.msra.mxu0 0.0
      %1821 = vmatpush.msra.mxu0 0.0
      %1822 = vmatpush.msra.mxu0 0.0
      %1823 = vmatpush.msra.mxu0 %v1777
      %1824 = vmatpush.msra.mxu0 %v1775
      %1825 = vmatpush.msra.mxu0 %v1773
      %1826 = vmatpush.msra.mxu0 %v1771
      %1827 = vmatmul.f32.gmra.mxu0 %v1800
      %v1828 = vpop.f32.mrf.mxu0
      %v1829 = vadd.f32 %v1782, %v1828
      %1830 = vmatmul.f32.gmra.mxu0 %v1803
      %v1831 = vpop.f32.mrf.mxu0
      %v1832 = vadd.f32 %v1787, %v1831
      %1833 = vmatmul.f32.gmra.mxu0 %v1806
      %v1834 = vpop.f32.mrf.mxu0
      %v1835 = vadd.f32 %v1792, %v1834
      %1836 = vmatmul.f32.gmra.mxu0 %v1809
      %v1837 = vpop.f32.mrf.mxu0
      %v1838 = vadd.f32 %v1797, %v1837
      %1839 = vdwg.mxu0
      %1840 = vmatpush.msra.mxu0 0.0
      %1841 = vmatpush.msra.mxu0 0.0
      %1842 = vmatpush.msra.mxu0 0.0
      %1843 = vmatpush.msra.mxu0 0.0
      %1844 = vmatpush.msra.mxu0 0.0
      %1845 = vmatpush.msra.mxu0 0.0
      %1846 = vmatpush.msra.mxu0 0.0
      %1847 = vmatpush.msra.mxu0 0.0
      %1848 = vmatpush.msra.mxu0 0.0
      %1849 = vmatpush.msra.mxu0 0.0
      %1850 = vmatpush.msra.mxu0 0.0
      %1851 = vmatpush.msra.mxu0 0.0
      %1852 = vmatpush.msra.mxu0 %v1778
      %1853 = vmatpush.msra.mxu0 %v1776
      %1854 = vmatpush.msra.mxu0 %v1774
      %1855 = vmatpush.msra.mxu0 %v1772
      %1856 = vmatmul.f32.gmra.mxu0 %v1800
      %v1857 = vpop.f32.mrf.mxu0
      %v1858 = vadd.f32 %v1782, %v1857
      %1859 = vmatmul.f32.gmra.mxu0 %v1803
      %v1860 = vpop.f32.mrf.mxu0
      %v1861 = vadd.f32 %v1787, %v1860
      %1862 = vmatmul.f32.gmra.mxu0 %v1806
      %v1863 = vpop.f32.mrf.mxu0
      %v1864 = vadd.f32 %v1792, %v1863
      %1865 = vmatmul.f32.gmra.mxu0 %v1809
      %v1866 = vpop.f32.mrf.mxu0
      %v1867 = vadd.f32 %v1797, %v1866
      %1868 = vdwg.mxu0
      %v1869 = vadd.f32 %v1609, %v1829
      %v1870 = vadd.f32 %v1610, %v1858
      %v1871 = vadd.f32 %v1611, %v1832
      %v1872 = vadd.f32 %v1612, %v1861
      %v1873 = vadd.f32 %v1613, %v1835
      %v1874 = vadd.f32 %v1614, %v1864
      %v1875 = vadd.f32 %v1615, %v1838
      %v1876 = vadd.f32 %v1616, %v1867
      %1877 = vrot.lane.b32.xlu0 %v1869, 4
      %v1878 = vpop.permute.xlu0 %1877
      %1879 = vrot.lane.b32.xlu0 %v1871, 4
      %v1880 = vpop.permute.xlu0 %1879
      %1881 = vrot.lane.b32.xlu0 %v1873, 4
      %v1882 = vpop.permute.xlu0 %1881
      %1883 = vrot.lane.b32.xlu0 %v1875, 4
      %v1884 = vpop.permute.xlu0 %1883
      %1885 = vrot.lane.b32.xlu0 %v1870, 4
      %v1886 = vpop.permute.xlu0 %1885
      %1887 = vrot.lane.b32.xlu0 %v1872, 4
      %v1888 = vpop.permute.xlu0 %1887
      %1889 = vrot.lane.b32.xlu0 %v1874, 4
      %v1890 = vpop.permute.xlu0 %1889
      %1891 = vrot.lane.b32.xlu0 %v1876, 4
      %v1892 = vpop.permute.xlu0 %1891
      %v1893 = vsel %vm833, %v1878, %v1886
      %v1894 = vsel %vm833, %v1880, %v1888
      %v1895 = vsel %vm833, %v1882, %v1890
      %v1896 = vsel %vm833, %v1884, %v1892
      %v1897 = vsel %vm833, %v1886, %v1878
      %v1898 = vsel %vm833, %v1888, %v1880
      %v1899 = vsel %vm833, %v1890, %v1882
      %v1900 = vsel %vm833, %v1892, %v1884
      %v1901 = vsel %vm122, %v1897, 0.0
      %v1902 = vsel %vm123, %v1893, 0.0
      %v1903 = vsel %vm122, %v1898, 0.0
      %v1904 = vsel %vm123, %v1894, 0.0
      %v1905 = vsel %vm122, %v1899, 0.0
      %v1906 = vsel %vm123, %v1895, 0.0
      %v1907 = vsel %vm122, %v1900, 0.0
      %v1908 = vsel %vm123, %v1896, 0.0
      %1909 = vrot.lane.b32.xlu0 %v1869, 124
      %v1910 = vpop.permute.xlu0 %1909
      %1911 = vrot.lane.b32.xlu0 %v1871, 124
      %v1912 = vpop.permute.xlu0 %1911
      %1913 = vrot.lane.b32.xlu0 %v1873, 124
      %v1914 = vpop.permute.xlu0 %1913
      %1915 = vrot.lane.b32.xlu0 %v1875, 124
      %v1916 = vpop.permute.xlu0 %1915
      %1917 = vrot.lane.b32.xlu0 %v1870, 124
      %v1918 = vpop.permute.xlu0 %1917
      %1919 = vrot.lane.b32.xlu0 %v1872, 124
      %v1920 = vpop.permute.xlu0 %1919
      %1921 = vrot.lane.b32.xlu0 %v1874, 124
      %v1922 = vpop.permute.xlu0 %1921
      %1923 = vrot.lane.b32.xlu0 %v1876, 124
      %v1924 = vpop.permute.xlu0 %1923
      %v1925 = vsel %vm866, %v1910, %v1918
      %v1926 = vsel %vm866, %v1912, %v1920
      %v1927 = vsel %vm866, %v1914, %v1922
      %v1928 = vsel %vm866, %v1916, %v1924
      %v1929 = vsel %vm866, %v1918, %v1910
      %v1930 = vsel %vm866, %v1920, %v1912
      %v1931 = vsel %vm866, %v1922, %v1914
      %v1932 = vsel %vm866, %v1924, %v1916
      %v1933 = vsel %vm130, %v1925, 0.0
      %v1934 = vsel %vm131, %v1929, 0.0
      %v1935 = vsel %vm130, %v1926, 0.0
      %v1936 = vsel %vm131, %v1930, 0.0
      %v1937 = vsel %vm130, %v1927, 0.0
      %v1938 = vsel %vm131, %v1931, 0.0
      %v1939 = vsel %vm130, %v1928, 0.0
      %v1940 = vsel %vm131, %v1932, 0.0
      %1942 = vset.pattern.permute.xlu0 0
      %1943 = vperm.xlu0 %1942, %v1231
      %v1944 = vpop.permute.xlu0 %1943
      %1947 = vset.pattern.permute.xlu0 0
      %1948 = vperm.xlu0 %1947, %v1232
      %v1949 = vpop.permute.xlu0 %1948
      %1952 = vset.pattern.permute.xlu0 0
      %1953 = vperm.xlu0 %1952, %v1233
      %v1954 = vpop.permute.xlu0 %1953
      %1957 = vset.pattern.permute.xlu0 0
      %1958 = vperm.xlu0 %1957, %v1234
      %v1959 = vpop.permute.xlu0 %1958
      %v1962 = vsel %vm377, %v1218, 0
      %v1965 = vsel %vm377, %v1219, 0
      %v1968 = vsel %vm377, %v1220, 0
      %v1971 = vsel %vm377, %v1221, 0
      %1973 = vmatpush.msra.mxu0 0.0
      %1974 = vmatpush.msra.mxu0 0.0
      %1975 = vmatpush.msra.mxu0 0.0
      %1976 = vmatpush.msra.mxu0 0.0
      %1977 = vmatpush.msra.mxu0 %v1939
      %1978 = vmatpush.msra.mxu0 %v1937
      %1979 = vmatpush.msra.mxu0 %v1935
      %1980 = vmatpush.msra.mxu0 %v1933
      %1981 = vmatpush.msra.mxu0 %v1875
      %1982 = vmatpush.msra.mxu0 %v1873
      %1983 = vmatpush.msra.mxu0 %v1871
      %1984 = vmatpush.msra.mxu0 %v1869
      %1985 = vmatpush.msra.mxu0 %v1907
      %1986 = vmatpush.msra.mxu0 %v1905
      %1987 = vmatpush.msra.mxu0 %v1903
      %1988 = vmatpush.msra.mxu0 %v1901
      %1989 = vmatmul.f32.gmra.mxu0 %v1962
      %v1990 = vpop.f32.mrf.mxu0
      %v1991 = vadd.f32 %v1944, %v1990
      %1992 = vmatmul.f32.gmra.mxu0 %v1965
      %v1993 = vpop.f32.mrf.mxu0
      %v1994 = vadd.f32 %v1949, %v1993
      %1995 = vmatmul.f32.gmra.mxu0 %v1968
      %v1996 = vpop.f32.mrf.mxu0
      %v1997 = vadd.f32 %v1954, %v1996
      %1998 = vmatmul.f32.gmra.mxu0 %v1971
      %v1999 = vpop.f32.mrf.mxu0
      %v2000 = vadd.f32 %v1959, %v1999
      %2001 = vdwg.mxu0
      %2002 = vmatpush.msra.mxu0 0.0
      %2003 = vmatpush.msra.mxu0 0.0
      %2004 = vmatpush.msra.mxu0 0.0
      %2005 = vmatpush.msra.mxu0 0.0
      %2006 = vmatpush.msra.mxu0 %v1940
      %2007 = vmatpush.msra.mxu0 %v1938
      %2008 = vmatpush.msra.mxu0 %v1936
      %2009 = vmatpush.msra.mxu0 %v1934
      %2010 = vmatpush.msra.mxu0 %v1876
      %2011 = vmatpush.msra.mxu0 %v1874
      %2012 = vmatpush.msra.mxu0 %v1872
      %2013 = vmatpush.msra.mxu0 %v1870
      %2014 = vmatpush.msra.mxu0 %v1908
      %2015 = vmatpush.msra.mxu0 %v1906
      %2016 = vmatpush.msra.mxu0 %v1904
      %2017 = vmatpush.msra.mxu0 %v1902
      %2018 = vmatmul.f32.gmra.mxu0 %v1962
      %v2019 = vpop.f32.mrf.mxu0
      %v2020 = vadd.f32 %v1944, %v2019
      %2021 = vmatmul.f32.gmra.mxu0 %v1965
      %v2022 = vpop.f32.mrf.mxu0
      %v2023 = vadd.f32 %v1949, %v2022
      %2024 = vmatmul.f32.gmra.mxu0 %v1968
      %v2025 = vpop.f32.mrf.mxu0
      %v2026 = vadd.f32 %v1954, %v2025
      %2027 = vmatmul.f32.gmra.mxu0 %v1971
      %v2028 = vpop.f32.mrf.mxu0
      %v2029 = vadd.f32 %v1959, %v2028
      %2030 = vdwg.mxu0
      %v2031 = vmax.f32 %v1991, 0.0
      %v2032 = vmax.f32 %v2020, 0.0
      %v2033 = vmax.f32 %v1994, 0.0
      %v2034 = vmax.f32 %v2023, 0.0
      %v2035 = vmax.f32 %v1997, 0.0
      %v2036 = vmax.f32 %v2026, 0.0
      %v2037 = vmax.f32 %v2000, 0.0
      %v2038 = vmax.f32 %v2029, 0.0
      %2040 = vset.pattern.permute.xlu0 0
      %2041 = vperm.xlu0 %2040, %v1257
      %v2042 = vpop.permute.xlu0 %2041
      %2045 = vset.pattern.permute.xlu0 0
      %2046 = vperm.xlu0 %2045, %v1258
      %v2047 = vpop.permute.xlu0 %2046
      %2050 = vset.pattern.permute.xlu0 0
      %2051 = vperm.xlu0 %2050, %v1259
      %v2052 = vpop.permute.xlu0 %2051
      %2055 = vset.pattern.permute.xlu0 0
      %2056 = vperm.xlu0 %2055, %v1260
      %v2057 = vpop.permute.xlu0 %2056
      %v2060 = vsel %vm476, %v1244, 0
      %v2063 = vsel %vm476, %v1245, 0
      %v2066 = vsel %vm476, %v1246, 0
      %v2069 = vsel %vm476, %v1247, 0
      %2071 = vmatpush.msra.mxu0 0.0
      %2072 = vmatpush.msra.mxu0 0.0
      %2073 = vmatpush.msra.mxu0 0.0
      %2074 = vmatpush.msra.mxu0 0.0
      %2075 = vmatpush.msra.mxu0 0.0
      %2076 = vmatpush.msra.mxu0 0.0
      %2077 = vmatpush.msra.mxu0 0.0
      %2078 = vmatpush.msra.mxu0 0.0
      %2079 = vmatpush.msra.mxu0 0.0
      %2080 = vmatpush.msra.mxu0 0.0
      %2081 = vmatpush.msra.mxu0 0.0
      %2082 = vmatpush.msra.mxu0 0.0
      %2083 = vmatpush.msra.mxu0 %v2037
      %2084 = vmatpush.msra.mxu0 %v2035
      %2085 = vmatpush.msra.mxu0 %v2033
      %2086 = vmatpush.msra.mxu0 %v2031
      %2087 = vmatmul.f32.gmra.mxu0 %v2060
      %v2088 = vpop.f32.mrf.mxu0
      %v2089 = vadd.f32 %v2042, %v2088
      %2090 = vmatmul.f32.gmra.mxu0 %v2063
      %v2091 = vpop.f32.mrf.mxu0
      %v2092 = vadd.f32 %v2047, %v2091
      %2093 = vmatmul.f32.gmra.mxu0 %v2066
      %v2094 = vpop.f32.mrf.mxu0
      %v2095 = vadd.f32 %v2052, %v2094
      %2096 = vmatmul.f32.gmra.mxu0 %v2069
      %v2097 = vpop.f32.mrf.mxu0
      %v2098 = vadd.f32 %v2057, %v2097
      %2099 = vdwg.mxu0
      %2100 = vmatpush.msra.mxu0 0.0
      %2101 = vmatpush.msra.mxu0 0.0
      %2102 = vmatpush.msra.mxu0 0.0
      %2103 = vmatpush.msra.mxu0 0.0
      %2104 = vmatpush.msra.mxu0 0.0
      %2105 = vmatpush.msra.mxu0 0.0
      %2106 = vmatpush.msra.mxu0 0.0
      %2107 = vmatpush.msra.mxu0 0.0
      %2108 = vmatpush.msra.mxu0 0.0
      %2109 = vmatpush.msra.mxu0 0.0
      %2110 = vmatpush.msra.mxu0 0.0
      %2111 = vmatpush.msra.mxu0 0.0
      %2112 = vmatpush.msra.mxu0 %v2038
      %2113 = vmatpush.msra.mxu0 %v2036
      %2114 = vmatpush.msra.mxu0 %v2034
      %2115 = vmatpush.msra.mxu0 %v2032
      %2116 = vmatmul.f32.gmra.mxu0 %v2060
      %v2117 = vpop.f32.mrf.mxu0
      %v2118 = vadd.f32 %v2042, %v2117
      %2119 = vmatmul.f32.gmra.mxu0 %v2063
      %v2120 = vpop.f32.mrf.mxu0
      %v2121 = vadd.f32 %v2047, %v2120
      %2122 = vmatmul.f32.gmra.mxu0 %v2066
      %v2123 = vpop.f32.mrf.mxu0
      %v2124 = vadd.f32 %v2052, %v2123
      %2125 = vmatmul.f32.gmra.mxu0 %v2069
      %v2126 = vpop.f32.mrf.mxu0
      %v2127 = vadd.f32 %v2057, %v2126
      %2128 = vdwg.mxu0
      %v2129 = vadd.f32 %v1869, %v2089
      %v2130 = vadd.f32 %v1870, %v2118
      %v2131 = vadd.f32 %v1871, %v2092
      %v2132 = vadd.f32 %v1872, %v2121
      %v2133 = vadd.f32 %v1873, %v2095
      %v2134 = vadd.f32 %v1874, %v2124
      %v2135 = vadd.f32 %v1875, %v2098
      %v2136 = vadd.f32 %v1876, %v2127
      %2138 = vset.pattern.permute.xlu0 0
      %2139 = vperm.xlu0 %2138, %v1265
      %v2140 = vpop.permute.xlu0 %2139
      %v2143 = vsel %vm476, %v1263, 0
      %2145 = vmatpush.msra.mxu0 0.0
      %2146 = vmatpush.msra.mxu0 0.0
      %2147 = vmatpush.msra.mxu0 0.0
      %2148 = vmatpush.msra.mxu0 0.0
      %2149 = vmatpush.msra.mxu0 0.0
      %2150 = vmatpush.msra.mxu0 0.0
      %2151 = vmatpush.msra.mxu0 0.0
      %2152 = vmatpush.msra.mxu0 0.0
      %2153 = vmatpush.msra.mxu0 0.0
      %2154 = vmatpush.msra.mxu0 0.0
      %2155 = vmatpush.msra.mxu0 0.0
      %2156 = vmatpush.msra.mxu0 0.0
      %2157 = vmatpush.msra.mxu0 %v2135
      %2158 = vmatpush.msra.mxu0 %v2133
      %2159 = vmatpush.msra.mxu0 %v2131
      %2160 = vmatpush.msra.mxu0 %v2129
      %2161 = vmatmul.f32.gmra.mxu0 %v2143
      %v2162 = vpop.f32.mrf.mxu0
      %v2163 = vadd.f32 %v2140, %v2162
      %2164 = vdwg.mxu0
      %2165 = vmatpush.msra.mxu0 0.0
      %2166 = vmatpush.msra.mxu0 0.0
      %2167 = vmatpush.msra.mxu0 0.0
      %2168 = vmatpush.msra.mxu0 0.0
      %2169 = vmatpush.msra.mxu0 0.0
      %2170 = vmatpush.msra.mxu0 0.0
      %2171 = vmatpush.msra.mxu0 0.0
      %2172 = vmatpush.msra.mxu0 0.0
      %2173 = vmatpush.msra.mxu0 0.0
      %2174 = vmatpush.msra.mxu0 0.0
      %2175 = vmatpush.msra.mxu0 0.0
      %2176 = vmatpush.msra.mxu0 0.0
      %2177 = vmatpush.msra.mxu0 %v2136
      %2178 = vmatpush.msra.mxu0 %v2134
      %2179 = vmatpush.msra.mxu0 %v2132
      %2180 = vmatpush.msra.mxu0 %v2130
      %2181 = vmatmul.f32.gmra.mxu0 %v2143
      %v2182 = vpop.f32.mrf.mxu0
      %v2183 = vadd.f32 %v2140, %v2182
      %2184 = vdwg.mxu0
      %s2185 = sadd.s32 %s1130, 1
      %s2186 = smul.u32 %s2185, 2
      %s2187 = smul.addr %s2186, 8
      %s2188 = scalar_lea.vmem [#allocation2], %s2187
      %2189 = vst [vmem:[%s2188] sm:$0xff] %v2163
      %2190 = vst [vmem:[%s2188 + $0x8] sm:$0xff] %v2183
    $region74: #{tpu_custom_call.1} parent=1 // loop_footer
      %s1134 = sadd.s32 1, %s1130
    $region75: #{tpu_custom_call.1} parent=1 // loop_footer_branch
      %1129 = sbr.rel target = $region71
    $region76: #{tpu_custom_call.1} parent=1 // loop_exit
      _
    // Predicated region
    $region77: #{tpu_custom_call.1} parent=1 // pred_check
      _
    $region78: #{tpu_custom_call.1} parent=1 // pred_check_branch
      %2192 = sbr.rel (0) target = $region80
    $region79: #{tpu_custom_call.1} parent=1 // pred_region
      %2194 = vsyncadd [#allocation3], 0
      %s2195 = sshll.u32 [#allocation2], 4
      %s2196 = int_to_ptr.vmem [resolvable:$true] %s2195
      %s2197 = sshll.u32 %s17, 4
      %s2198 = int_to_ptr.hbm [resolvable:$true] %s2197
      %2203 = dma.vmem_to_hbm [thread:$0]  %s2196, 768, %s2198, [#allocation3], 256, 256, 16
    $region80: #{tpu_custom_call.1} parent=1 // pred_fallthru
      _
    // Predicated region
    $region81: #{tpu_custom_call.1} parent=1 // pred_check
      _
    $region82: #{tpu_custom_call.1} parent=1 // pred_check_branch
      %2205 = sbr.rel (0) target = $region84
    $region83: #{tpu_custom_call.1} parent=1 // pred_region
      %2207 = dma.done [#allocation3], 768
    $region84: #{tpu_custom_call.1} parent=1 // pred_fallthru
      _
    %2208 = vsyncpa [#allocation3], 1

</llo_original>
